<compile_context>
chip_gen: v6e
topology: v6e:2x2x1
jax: 0.10.0
libtpu: 0.0.40
codegen_flags: <defaults>
</compile_context>

<pallas_src>
from functools import partial

import jax
import jax.numpy as jnp
from jax import lax
from jax.experimental import pallas as pl
from jax.experimental.pallas import tpu as pltpu


# ----------------------------------------------------------------------------
# Helpers: tile selection & VMEM-limit sizing
# ----------------------------------------------------------------------------
def _pick_tile(dim, pref, align):
    """Largest tile <= pref that divides `dim` and is a multiple of `align`;
    falls back to the full dim (always a legal block size)."""
    if dim <= pref:
        return dim
    t = (pref // align) * align
    while t >= align:
        if dim % t == 0:
            return t
        t -= align
    # TODO(synk): masked remainder tiles (pl.cdiv grid) for dims with no
    # aligned divisor; the full-dim fallback is correct but VMEM-heavy.
    return dim


def _vmem_cap_bytes():
    try:
        cap = int(pltpu.get_tpu_info().vmem_capacity_bytes)
    except Exception:
        cap = 64 * 1024 * 1024            # conservative (v7x per-TC VMEM)
    return max(cap, 64 * 1024 * 1024)


def _vmem_limit(need_bytes):
    """Derive vmem_limit_bytes from the actual buffer bytes + headroom,
    capped below the physical per-core VMEM of the current generation."""
    cap = _vmem_cap_bytes()
    want = int(need_bytes * 1.5) + (4 << 20)   # headroom for compiler scratch
    return int(min(max(want, 32 << 20), int(cap * 0.9)))


# ----------------------------------------------------------------------------
# Tiled linear kernel: o = x @ w + b   (x:(M,K), w:(K,N), b:(1,N) f32)
# grid = (M//tm, N//tn, K//tk), f32 VMEM accumulator, reduction axis last.
# ----------------------------------------------------------------------------
def _linear_kernel(x_ref, w_ref, b_ref, o_ref, acc_ref):
    k = pl.program_id(2)

    @pl.when(k == 0)
    def _():
        acc_ref[...] = jnp.zeros_like(acc_ref)

    acc_ref[...] += jnp.dot(x_ref[...], w_ref[...],
                            preferred_element_type=jnp.float32)

    @pl.when(k == pl.num_programs(2) - 1)
    def _():
        o_ref[...] = (acc_ref[...] + b_ref[...].astype(jnp.float32)
                      ).astype(o_ref.dtype)


def linear(x2d, w, b, *, out_dtype=None, tm=512, tn=512, tk=512):
    """x2d: (M, K), w: (K, N), b: (N,) -> (M, N)."""
    M, K = x2d.shape
    N = w.shape[1]
    out_dtype = x2d.dtype if out_dtype is None else out_dtype

    tm = _pick_tile(M, tm, 8)
    tn = _pick_tile(N, tn, 128)
    tk = _pick_tile(K, tk, 128)
    grid = (M // tm, N // tn, K // tk)

    x_sz = x2d.dtype.itemsize
    w_sz = w.dtype.itemsize
    o_sz = jnp.dtype(out_dtype).itemsize
    need = (2 * tm * tk * x_sz + 2 * tk * tn * w_sz + 2 * tn * 4
            + 2 * tm * tn * o_sz + tm * tn * 4)

    cost = pl.CostEstimate(
        flops=2 * M * N * K,
        transcendentals=0,
        bytes_accessed=int(M * K * x_sz + K * N * w_sz + N * 4 + M * N * o_sz),
    )

    return pl.pallas_call(
        _linear_kernel,
        out_shape=jax.ShapeDtypeStruct((M, N), out_dtype),
        grid_spec=pltpu.PrefetchScalarGridSpec(
            num_scalar_prefetch=0,
            grid=grid,
            in_specs=[
                pl.BlockSpec((tm, tk), lambda i, j, k: (i, k)),
                pl.BlockSpec((tk, tn), lambda i, j, k: (k, j)),
                pl.BlockSpec((1, tn), lambda i, j, k: (0, j)),
            ],
            out_specs=pl.BlockSpec((tm, tn), lambda i, j, k: (i, j)),
            scratch_shapes=[pltpu.VMEM((tm, tn), jnp.float32)],
        ),
        compiler_params=pltpu.CompilerParams(
            dimension_semantics=("parallel", "parallel", "arbitrary"),
            vmem_limit_bytes=_vmem_limit(need),
        ),
        cost_estimate=cost,
    )(x2d, w, b.reshape(1, N).astype(jnp.float32))


# ----------------------------------------------------------------------------
# Flash-style multi-head attention kernel.
#   grid = (B, L//tq, L//tkv)   (kv axis last = reduction / "arbitrary")
#   q_ref : (1, tq, D)   k_ref, v_ref : (1, tkv, D)   o_ref : (1, tq, D)
#   scratch: m (n_head, tq, 1), l (n_head, tq, 1), acc (tq, D)  -- all f32
# Heads live in dh-wide column chunks of the D axis; the online-softmax
# update writes each head's partial result into its column block of the acc
# scratch; the final store is one lane-dense D-wide write (== concat).
# ----------------------------------------------------------------------------
def _attention_kernel(q_ref, k_ref, v_ref, o_ref, m_sc, l_sc, acc_sc,
                      *, n_head, scale):
    ki = pl.program_id(2)
    D = q_ref.shape[-1]
    dh = D // n_head

    @pl.when(ki == 0)
    def _():
        m_sc[...] = jnp.full_like(m_sc, -jnp.inf)
        l_sc[...] = jnp.zeros_like(l_sc)
        acc_sc[...] = jnp.zeros_like(acc_sc)

    # TODO(synk): attention mask (masked_fill before softmax) not wired --
    # matches the module's default mask=None call path.
    for h in range(n_head):                 # static unroll over heads
        lo = h * dh
        # TODO(synk): for dh < 128 these lane slices cost an XLU relayout;
        # padding head_dim to 128 in the QKV weight layout would avoid it.
        q_h = q_ref[0, :, lo:lo + dh]
        q_h = q_h * jnp.asarray(scale, dtype=q_h.dtype)   # fold 1/sqrt(dh)
        k_h = k_ref[0, :, lo:lo + dh]
        v_h = v_ref[0, :, lo:lo + dh]

        # QK^T contracted on the head dim (no explicit transpose), f32 scores.
        s = lax.dot_general(q_h, k_h, (((1,), (1,)), ((), ())),
                            preferred_element_type=jnp.float32)   # (tq, tkv)

        # Online (flash) softmax update -- f32 math (v5e has no bf16 VPU/EUP).
        m_prev = m_sc[h]                                           # (tq, 1)
        m_new = jnp.maximum(m_prev, jnp.max(s, axis=-1, keepdims=True))
        alpha = jnp.exp(m_prev - m_new)
        p = jnp.exp(s - m_new)
        l_sc[h] = alpha * l_sc[h] + jnp.sum(p, axis=-1, keepdims=True)
        pv = jnp.dot(p.astype(v_h.dtype), v_h,
                     preferred_element_type=jnp.float32)           # (tq, dh)
        acc_sc[:, lo:lo + dh] = alpha * acc_sc[:, lo:lo + dh] + pv
        m_sc[h] = m_new

    @pl.when(ki == pl.num_programs(2) - 1)
    def _():
        # Normalize each head inside the f32 scratch, then one lane-dense
        # D-wide store (== PyTorch concat of heads) -- no per-head concat,
        # no vreg spills of n_head live results.
        for h in range(n_head):
            lo = h * dh
            inv = pl.reciprocal(l_sc[h])                           # exact
            acc_sc[:, lo:lo + dh] = acc_sc[:, lo:lo + dh] * inv
        o_ref[0] = acc_sc[...].astype(o_ref.dtype)


def _col_map_q(c):
    return lambda b, qi, ki: (b, qi, c)


def _col_map_kv(c):
    return lambda b, qi, ki: (b, ki, c)


def attention(qkv, n_head, *, tq=256, tkv=512):
    """Multi-head scaled-dot-product attention over a fused (B, L, 3D) QKV
    tensor (head h occupies columns [h*dh, (h+1)*dh) of each D-block)."""
    B, L, D3 = qkv.shape
    D = D3 // 3
    assert 3 * D == D3 and D % n_head == 0
    dh = D // n_head

    tq = _pick_tile(L, tq, 8)
    tkv = _pick_tile(L, tkv, 8)
    grid = (B, L // tq, L // tkv)

    if D % 128 == 0:
        # Select Q/K/V column blocks of the fused tensor directly in the
        # index_maps: no HBM slice copies of the (B, L, 3D) activation.
        q_in = k_in = v_in = qkv
        qc, kc, vc = 0, 1, 2
    else:
        # TODO(synk): d_model not a multiple of 128 -> the (8,128) rule
        # forbids a D-wide block of the 3D-wide fused tensor; fall back to
        # XLA slices (one extra HBM pass over QKV).
        q_in, k_in, v_in = qkv[..., :D], qkv[..., D:2 * D], qkv[..., 2 * D:]
        qc = kc = vc = 0

    sz = qkv.dtype.itemsize
    need = (2 * (tq * D + 2 * tkv * D) * sz          # q/k/v double-buffered
            + 2 * tq * D * sz                        # output double-buffered
            + (2 * n_head * tq * 128 + tq * D) * 4   # m/l (lane-padded) + acc
            + 2 * tq * tkv * 4)                      # score/prob temporaries

    cost = pl.CostEstimate(
        flops=4 * B * n_head * L * L * dh,
        transcendentals=B * n_head * L * L,
        bytes_accessed=int(4 * B * L * D * sz),
    )

    return pl.pallas_call(
        partial(_attention_kernel, n_head=n_head, scale=1.0 / (dh ** 0.5)),
        out_shape=jax.ShapeDtypeStruct((B, L, D), qkv.dtype),
        grid_spec=pltpu.PrefetchScalarGridSpec(
            num_scalar_prefetch=0,
            grid=grid,
            in_specs=[
                pl.BlockSpec((1, tq, D), _col_map_q(qc)),
                pl.BlockSpec((1, tkv, D), _col_map_kv(kc)),
                pl.BlockSpec((1, tkv, D), _col_map_kv(vc)),
            ],
            out_specs=pl.BlockSpec((1, tq, D), lambda b, qi, ki: (b, qi, 0)),
            scratch_shapes=[
                pltpu.VMEM((n_head, tq, 1), jnp.float32),   # running max m
                pltpu.VMEM((n_head, tq, 1), jnp.float32),   # running sum l
                pltpu.VMEM((tq, D), jnp.float32),           # output acc
            ],
        ),
        compiler_params=pltpu.CompilerParams(
            dimension_semantics=("parallel", "parallel", "arbitrary"),
            vmem_limit_bytes=_vmem_limit(need),
        ),
        cost_estimate=cost,
    )(q_in, k_in, v_in)


# ----------------------------------------------------------------------------
# MultiHeadAttention forward
# ----------------------------------------------------------------------------
def prepare_params(params, compute_dtype=jnp.bfloat16):
    """One-time parameter prep (call OUTSIDE the jitted forward): fuse the
    Q/K/V weights into one (D, 3D) matrix and cast matmul weights to the MXU
    compute dtype. Biases stay f32 (added to the f32 accumulator)."""
    w_qkv = jnp.concatenate([params["wq"], params["wk"], params["wv"]],
                            axis=1).astype(compute_dtype)
    b_qkv = jnp.concatenate([params["bq"], params["bk"], params["bv"]],
                            axis=0).astype(jnp.float32)
    return {
        "w_qkv": w_qkv, "b_qkv": b_qkv,
        "wo": params["wo"].astype(compute_dtype),
        "bo": params["bo"].astype(jnp.float32),
    }


def multi_head_attention(x, prep, n_head):
    """x: (B, L, D) -> (B, L, D); mask=None path of the PyTorch module."""
    B, L, D = x.shape
    assert D % n_head == 0, "d_model must be divisible by n_head"
    cdtype = prep["w_qkv"].dtype

    x2 = x.reshape(B * L, D).astype(cdtype)

    # Fused QKV projection: one tiled GEMM over the pre-fused (D, 3D) weight.
    qkv = linear(x2, prep["w_qkv"], prep["b_qkv"], out_dtype=cdtype,
                 tn=1024).reshape(B, L, 3 * D)

    # Head split / softmax(QK^T/sqrt(dh)) V / head concat -- all in-kernel,
    # consuming the fused QKV tensor directly.
    out = attention(qkv, n_head)                               # (B, L, D)

    # Output projection back to the input dtype.
    # TODO(synk): optionally fuse this GEMM into the attention epilogue to
    # skip one HBM round-trip of the (B, L, D) attention output.
    out = linear(out.reshape(B * L, D), prep["wo"], prep["bo"],
                 out_dtype=x.dtype)
    return out.reshape(B, L, D)


# ----------------------------------------------------------------------------
# Pure-JAX reference (for correctness check)
# ----------------------------------------------------------------------------
def reference_mha(x, params, n_head):
    B, L, D = x.shape
    dh = D // n_head

    def lin(t, w, b):
        return t @ w + b

    q = lin(x, params["wq"], params["bq"])
    k = lin(x, params["wk"], params["bk"])
    v = lin(x, params["wv"], params["bv"])

    def split(t):
        return t.reshape(B, L, n_head, dh).transpose(0, 2, 1, 3)

    qh, kh, vh = split(q), split(k), split(v)
    s = jnp.einsum("bhqd,bhkd->bhqk", qh, kh) / jnp.sqrt(jnp.float32(dh))
    p = jax.nn.softmax(s, axis=-1)
    o = jnp.einsum("bhqk,bhkd->bhqd", p, vh)
    o = o.transpose(0, 2, 1, 3).reshape(B, L, D)
    return lin(o, params["wo"], params["bo"])


def init_params(key, d_model):
    # Deterministic init mimicking nn.Linear: U(-1/sqrt(in), 1/sqrt(in)).
    ks = jax.random.split(key, 8)
    bound = 1.0 / (d_model ** 0.5)

    def u(k, shape):
        return jax.random.uniform(k, shape, jnp.float32, -bound, bound)

    # Weights stored as (in_features, out_features) so kernels do x @ w + b.
    return {
        "wq": u(ks[0], (d_model, d_model)), "bq": u(ks[1], (d_model,)),
        "wk": u(ks[2], (d_model, d_model)), "bk": u(ks[3], (d_model,)),
        "wv": u(ks[4], (d_model, d_model)), "bv": u(ks[5], (d_model,)),
        "wo": u(ks[6], (d_model, d_model)), "bo": u(ks[7], (d_model,)),
    }


if __name__ == "__main__":
    key = jax.random.PRNGKey(0)
    k_x, k_p = jax.random.split(key)

    batch, seq, d_model, n_head = 2, 8, 128, 4
    x = jax.random.normal(k_x, (batch, seq, d_model), dtype=jnp.float32)
    params = init_params(k_p, d_model)
    ref = reference_mha(x, params, n_head)

    mha = jax.jit(multi_head_attention, static_argnums=2)

    # 1) f32 datapath: tight correctness check.
    prep_f32 = prepare_params(params, jnp.float32)
    out_f32 = jax.block_until_ready(mha(x, prep_f32, n_head))
    assert out_f32.shape == (batch, seq, d_model)
    err_f32 = float(jnp.max(jnp.abs(out_f32 - ref)))
    assert jnp.allclose(out_f32, ref, atol=1e-2, rtol=1e-2), err_f32

    # 2) bf16 datapath (MXU-peak path on v6e/v7x), f32 accumulation & softmax.
    prep_bf16 = prepare_params(params, jnp.bfloat16)
    out_bf16 = jax.block_until_ready(mha(x, prep_bf16, n_head))
    assert out_bf16.shape == (batch, seq, d_model)
    err_bf16 = float(jnp.max(jnp.abs(out_bf16 - ref)))
    assert jnp.allclose(out_bf16, ref, atol=5e-2, rtol=5e-2), err_bf16

    print("KERNEL_OK")
</pallas_src>

<mosaic_0001>
module attributes {stable_mosaic.version = 11 : i64} {
  func.func @_linear_kernel(%arg0: i32, %arg1: i32, %arg2: i32, %arg3: memref<16x128xf32, #tpu.memory_space<vmem>>, %arg4: memref<128x384xf32, #tpu.memory_space<vmem>>, %arg5: memref<1x384xf32, #tpu.memory_space<vmem>>, %arg6: memref<16x384xf32, #tpu.memory_space<vmem>>, %arg7: memref<16x384xf32, #tpu.memory_space<vmem>>) attributes {dimension_semantics = [#tpu.dimension_semantics<parallel>, #tpu.dimension_semantics<parallel>, #tpu.dimension_semantics<arbitrary>], iteration_bounds = array<i64: 1, 1, 1>, scalar_prefetch = 0 : i64, scratch_operands = 1 : i64, tpu.core_type = #tpu.core_type<tc>, window_params = [{transform_indices = @transform_0, window_bounds = array<i64: 16, 128>}, {transform_indices = @transform_1, window_bounds = array<i64: 128, 384>}, {transform_indices = @transform_2, window_bounds = array<i64: 1, 384>}, {transform_indices = @transform_3, window_bounds = array<i64: 16, 384>}]} {
    %c0_i32 = arith.constant 0 : i32
    %0 = arith.cmpi eq, %arg2, %c0_i32 : i32
    %1 = arith.extui %0 : i1 to i32
    %c0_i32_0 = arith.constant 0 : i32
    %2 = arith.cmpi ne, %1, %c0_i32_0 : i32
    scf.if %2 {
      %cst_10 = arith.constant 0.000000e+00 : f32
      %12 = vector.broadcast %cst_10 : f32 to vector<16x384xf32>
      %c0_11 = arith.constant 0 : index
      %c0_12 = arith.constant 0 : index
      %13 = vector.load %arg7[%c0_11, %c0_12] : memref<16x384xf32, #tpu.memory_space<vmem>>, vector<16x384xf32>
      tpu.vector_store %arg7[%c0_11, %c0_12], %12 {strides = array<i32>} : memref<16x384xf32, #tpu.memory_space<vmem>>, vector<16x384xf32>,
    } else {
    }
    %c0 = arith.constant 0 : index
    %c0_1 = arith.constant 0 : index
    %3 = vector.load %arg7[%c0, %c0_1] : memref<16x384xf32, #tpu.memory_space<vmem>>, vector<16x384xf32>
    %c0_2 = arith.constant 0 : index
    %c0_3 = arith.constant 0 : index
    %4 = vector.load %arg3[%c0_2, %c0_3] : memref<16x128xf32, #tpu.memory_space<vmem>>, vector<16x128xf32>
    %c0_4 = arith.constant 0 : index
    %c0_5 = arith.constant 0 : index
    %5 = vector.load %arg4[%c0_4, %c0_5] : memref<128x384xf32, #tpu.memory_space<vmem>>, vector<128x384xf32>
    %cst = arith.constant dense<0.000000e+00> : vector<16x384xf32>
    %6 = tpu.matmul %4, %5, %cst {dimension_numbers = #tpu.dot_dimension_numbers<[1], [0], [0], [1], [0, 0, 1, 1], [], []>} : vector<16x128xf32>, vector<128x384xf32>, vector<16x384xf32> -> vector<16x384xf32>
    %7 = arith.addf %3, %6 : vector<16x384xf32>
    %c0_6 = arith.constant 0 : index
    %c0_7 = arith.constant 0 : index
    %8 = vector.load %arg7[%c0_6, %c0_7] : memref<16x384xf32, #tpu.memory_space<vmem>>, vector<16x384xf32>
    tpu.vector_store %arg7[%c0_6, %c0_7], %7 {strides = array<i32>} : memref<16x384xf32, #tpu.memory_space<vmem>>, vector<16x384xf32>,
    %c0_i32_8 = arith.constant 0 : i32
    %9 = arith.cmpi eq, %arg2, %c0_i32_8 : i32
    %10 = arith.extui %9 : i1 to i32
    %c0_i32_9 = arith.constant 0 : i32
    %11 = arith.cmpi ne, %10, %c0_i32_9 : i32
    scf.if %11 {
      %c0_10 = arith.constant 0 : index
      %c0_11 = arith.constant 0 : index
      %12 = vector.load %arg7[%c0_10, %c0_11] : memref<16x384xf32, #tpu.memory_space<vmem>>, vector<16x384xf32>
      %c0_12 = arith.constant 0 : index
      %c0_13 = arith.constant 0 : index
      %13 = vector.load %arg5[%c0_12, %c0_13] : memref<1x384xf32, #tpu.memory_space<vmem>>, vector<1x384xf32>
      %14 = vector.broadcast %13 : vector<1x384xf32> to vector<16x384xf32>
      %15 = arith.addf %12, %14 : vector<16x384xf32>
      %c0_14 = arith.constant 0 : index
      %c0_15 = arith.constant 0 : index
      %16 = vector.load %arg6[%c0_14, %c0_15] : memref<16x384xf32, #tpu.memory_space<vmem>>, vector<16x384xf32>
      tpu.vector_store %arg6[%c0_14, %c0_15], %15 {strides = array<i32>} : memref<16x384xf32, #tpu.memory_space<vmem>>, vector<16x384xf32>,
    } else {
    }
    return
  }
  func.func @transform_0(%arg0: i32, %arg1: i32, %arg2: i32) -> (i32, i32) {
    %c0_i32 = arith.constant 0 : i32
    return %arg0, %arg2 : i32, i32
  }
  func.func @transform_1(%arg0: i32, %arg1: i32, %arg2: i32) -> (i32, i32) {
    %c0_i32 = arith.constant 0 : i32
    return %arg2, %arg1 : i32, i32
  }
  func.func @transform_2(%arg0: i32, %arg1: i32, %arg2: i32) -> (i32, i32) {
    %c0_i32 = arith.constant 0 : i32
    %c0_i32_0 = arith.constant 0 : i32
    return %c0_i32, %arg1 : i32, i32
  }
  func.func @transform_3(%arg0: i32, %arg1: i32, %arg2: i32) -> (i32, i32) {
    %c0_i32 = arith.constant 0 : i32
    return %arg0, %arg1 : i32, i32
  }
}

module attributes {stable_mosaic.version = 11 : i64} {
  func.func @_linear_kernel(%arg0: i32, %arg1: i32, %arg2: i32, %arg3: memref<16x128xf32, #tpu.memory_space<vmem>>, %arg4: memref<128x128xf32, #tpu.memory_space<vmem>>, %arg5: memref<1x128xf32, #tpu.memory_space<vmem>>, %arg6: memref<16x128xf32, #tpu.memory_space<vmem>>, %arg7: memref<16x128xf32, #tpu.memory_space<vmem>>) attributes {dimension_semantics = [#tpu.dimension_semantics<parallel>, #tpu.dimension_semantics<parallel>, #tpu.dimension_semantics<arbitrary>], iteration_bounds = array<i64: 1, 1, 1>, scalar_prefetch = 0 : i64, scratch_operands = 1 : i64, tpu.core_type = #tpu.core_type<tc>, window_params = [{transform_indices = @transform_0, window_bounds = array<i64: 16, 128>}, {transform_indices = @transform_1, window_bounds = array<i64: 128, 128>}, {transform_indices = @transform_2, window_bounds = array<i64: 1, 128>}, {transform_indices = @transform_3, window_bounds = array<i64: 16, 128>}]} {
    %c0_i32 = arith.constant 0 : i32
    %0 = arith.cmpi eq, %arg2, %c0_i32 : i32
    %1 = arith.extui %0 : i1 to i32
    %c0_i32_0 = arith.constant 0 : i32
    %2 = arith.cmpi ne, %1, %c0_i32_0 : i32
    scf.if %2 {
      %cst_10 = arith.constant 0.000000e+00 : f32
      %12 = vector.broadcast %cst_10 : f32 to vector<16x128xf32>
      %c0_11 = arith.constant 0 : index
      %c0_12 = arith.constant 0 : index
      %13 = vector.load %arg7[%c0_11, %c0_12] : memref<16x128xf32, #tpu.memory_space<vmem>>, vector<16x128xf32>
      tpu.vector_store %arg7[%c0_11, %c0_12], %12 {strides = array<i32>} : memref<16x128xf32, #tpu.memory_space<vmem>>, vector<16x128xf32>,
    } else {
    }
    %c0 = arith.constant 0 : index
    %c0_1 = arith.constant 0 : index
    %3 = vector.load %arg7[%c0, %c0_1] : memref<16x128xf32, #tpu.memory_space<vmem>>, vector<16x128xf32>
    %c0_2 = arith.constant 0 : index
    %c0_3 = arith.constant 0 : index
    %4 = vector.load %arg3[%c0_2, %c0_3] : memref<16x128xf32, #tpu.memory_space<vmem>>, vector<16x128xf32>
    %c0_4 = arith.constant 0 : index
    %c0_5 = arith.constant 0 : index
    %5 = vector.load %arg4[%c0_4, %c0_5] : memref<128x128xf32, #tpu.memory_space<vmem>>, vector<128x128xf32>
    %cst = arith.constant dense<0.000000e+00> : vector<16x128xf32>
    %6 = tpu.matmul %4, %5, %cst {dimension_numbers = #tpu.dot_dimension_numbers<[1], [0], [0], [1], [0, 0, 1, 1], [], []>} : vector<16x128xf32>, vector<128x128xf32>, vector<16x128xf32> -> vector<16x128xf32>
    %7 = arith.addf %3, %6 : vector<16x128xf32>
    %c0_6 = arith.constant 0 : index
    %c0_7 = arith.constant 0 : index
    %8 = vector.load %arg7[%c0_6, %c0_7] : memref<16x128xf32, #tpu.memory_space<vmem>>, vector<16x128xf32>
    tpu.vector_store %arg7[%c0_6, %c0_7], %7 {strides = array<i32>} : memref<16x128xf32, #tpu.memory_space<vmem>>, vector<16x128xf32>,
    %c0_i32_8 = arith.constant 0 : i32
    %9 = arith.cmpi eq, %arg2, %c0_i32_8 : i32
    %10 = arith.extui %9 : i1 to i32
    %c0_i32_9 = arith.constant 0 : i32
    %11 = arith.cmpi ne, %10, %c0_i32_9 : i32
    scf.if %11 {
      %c0_10 = arith.constant 0 : index
      %c0_11 = arith.constant 0 : index
      %12 = vector.load %arg7[%c0_10, %c0_11] : memref<16x128xf32, #tpu.memory_space<vmem>>, vector<16x128xf32>
      %c0_12 = arith.constant 0 : index
      %c0_13 = arith.constant 0 : index
      %13 = vector.load %arg5[%c0_12, %c0_13] : memref<1x128xf32, #tpu.memory_space<vmem>>, vector<1x128xf32>
      %14 = vector.broadcast %13 : vector<1x128xf32> to vector<16x128xf32>
      %15 = arith.addf %12, %14 : vector<16x128xf32>
      %c0_14 = arith.constant 0 : index
      %c0_15 = arith.constant 0 : index
      %16 = vector.load %arg6[%c0_14, %c0_15] : memref<16x128xf32, #tpu.memory_space<vmem>>, vector<16x128xf32>
      tpu.vector_store %arg6[%c0_14, %c0_15], %15 {strides = array<i32>} : memref<16x128xf32, #tpu.memory_space<vmem>>, vector<16x128xf32>,
    } else {
    }
    return
  }
  func.func @transform_0(%arg0: i32, %arg1: i32, %arg2: i32) -> (i32, i32) {
    %c0_i32 = arith.constant 0 : i32
    return %arg0, %arg2 : i32, i32
  }
  func.func @transform_1(%arg0: i32, %arg1: i32, %arg2: i32) -> (i32, i32) {
    %c0_i32 = arith.constant 0 : i32
    return %arg2, %arg1 : i32, i32
  }
  func.func @transform_2(%arg0: i32, %arg1: i32, %arg2: i32) -> (i32, i32) {
    %c0_i32 = arith.constant 0 : i32
    %c0_i32_0 = arith.constant 0 : i32
    return %c0_i32, %arg1 : i32, i32
  }
  func.func @transform_3(%arg0: i32, %arg1: i32, %arg2: i32) -> (i32, i32) {
    %c0_i32 = arith.constant 0 : i32
    return %arg0, %arg1 : i32, i32
  }
}

module attributes {stable_mosaic.version = 11 : i64} {
  func.func @_attention_kernel(%arg0: i32, %arg1: i32, %arg2: i32, %arg3: memref<1x8x128xf32, #tpu.memory_space<vmem>>, %arg4: memref<1x8x128xf32, #tpu.memory_space<vmem>>, %arg5: memref<1x8x128xf32, #tpu.memory_space<vmem>>, %arg6: memref<1x8x128xf32, #tpu.memory_space<vmem>>, %arg7: memref<4x8x1xf32, #tpu.memory_space<vmem>>, %arg8: memref<4x8x1xf32, #tpu.memory_space<vmem>>, %arg9: memref<8x128xf32, #tpu.memory_space<vmem>>) attributes {dimension_semantics = [#tpu.dimension_semantics<parallel>, #tpu.dimension_semantics<parallel>, #tpu.dimension_semantics<arbitrary>], iteration_bounds = array<i64: 2, 1, 1>, scalar_prefetch = 0 : i64, scratch_operands = 3 : i64, tpu.core_type = #tpu.core_type<tc>, window_params = [{transform_indices = @transform_0, window_bounds = array<i64: 1, 8, 128>}, {transform_indices = @transform_1, window_bounds = array<i64: 1, 8, 128>}, {transform_indices = @transform_2, window_bounds = array<i64: 1, 8, 128>}, {transform_indices = @transform_3, window_bounds = array<i64: 1, 8, 128>}]} {
    %c0_i32 = arith.constant 0 : i32
    %0 = arith.cmpi eq, %arg2, %c0_i32 : i32
    %1 = arith.extui %0 : i1 to i32
    %c0_i32_0 = arith.constant 0 : i32
    %2 = arith.cmpi ne, %1, %c0_i32_0 : i32
    scf.if %2 {
      %cst_115 = arith.constant 0xFF800000 : f32
      %154 = vector.broadcast %cst_115 : f32 to vector<4x8x1xf32>
      %c0_116 = arith.constant 0 : index
      %c0_117 = arith.constant 0 : index
      %c0_118 = arith.constant 0 : index
      %155 = vector.load %arg7[%c0_116, %c0_117, %c0_118] : memref<4x8x1xf32, #tpu.memory_space<vmem>>, vector<4x8x1xf32>
      tpu.vector_store %arg7[%c0_116, %c0_117, %c0_118], %154 {strides = array<i32>} : memref<4x8x1xf32, #tpu.memory_space<vmem>>, vector<4x8x1xf32>,
      %cst_119 = arith.constant 0.000000e+00 : f32
      %156 = vector.broadcast %cst_119 : f32 to vector<4x8x1xf32>
      %c0_120 = arith.constant 0 : index
      %c0_121 = arith.constant 0 : index
      %c0_122 = arith.constant 0 : index
      %157 = vector.load %arg8[%c0_120, %c0_121, %c0_122] : memref<4x8x1xf32, #tpu.memory_space<vmem>>, vector<4x8x1xf32>
      tpu.vector_store %arg8[%c0_120, %c0_121, %c0_122], %156 {strides = array<i32>} : memref<4x8x1xf32, #tpu.memory_space<vmem>>, vector<4x8x1xf32>,
      %cst_123 = arith.constant 0.000000e+00 : f32
      %158 = vector.broadcast %cst_123 : f32 to vector<8x128xf32>
      %c0_124 = arith.constant 0 : index
      %c0_125 = arith.constant 0 : index
      %159 = vector.load %arg9[%c0_124, %c0_125] : memref<8x128xf32, #tpu.memory_space<vmem>>, vector<8x128xf32>
      tpu.vector_store %arg9[%c0_124, %c0_125], %158 {strides = array<i32>} : memref<8x128xf32, #tpu.memory_space<vmem>>, vector<8x128xf32>,
    } else {
    }
    %c0 = arith.constant 0 : index
    %c0_1 = arith.constant 0 : index
    %c0_2 = arith.constant 0 : index
    %3 = vector.load %arg3[%c0, %c0_1, %c0_2] : memref<1x8x128xf32, #tpu.memory_space<vmem>>, vector<1x8x32xf32>
    %4 = vector.shape_cast %3 : vector<1x8x32xf32> to vector<8x32xf32>
    %cst = arith.constant 0.176776692 : f32
    %5 = vector.broadcast %cst : f32 to vector<8x32xf32>
    %6 = arith.mulf %4, %5 : vector<8x32xf32>
    %c0_3 = arith.constant 0 : index
    %c0_4 = arith.constant 0 : index
    %c0_5 = arith.constant 0 : index
    %7 = vector.load %arg4[%c0_3, %c0_4, %c0_5] : memref<1x8x128xf32, #tpu.memory_space<vmem>>, vector<1x8x32xf32>
    %8 = vector.shape_cast %7 : vector<1x8x32xf32> to vector<8x32xf32>
    %c0_6 = arith.constant 0 : index
    %c0_7 = arith.constant 0 : index
    %c0_8 = arith.constant 0 : index
    %9 = vector.load %arg5[%c0_6, %c0_7, %c0_8] : memref<1x8x128xf32, #tpu.memory_space<vmem>>, vector<1x8x32xf32>
    %10 = vector.shape_cast %9 : vector<1x8x32xf32> to vector<8x32xf32>
    %cst_9 = arith.constant dense<0.000000e+00> : vector<8x8xf32>
    %11 = tpu.matmul %6, %8, %cst_9 {dimension_numbers = #tpu.dot_dimension_numbers<[1], [1], [0], [0], [0, 0, 1, 0], [], []>} : vector<8x32xf32>, vector<8x32xf32>, vector<8x8xf32> -> vector<8x8xf32>
    %c0_10 = arith.constant 0 : index
    %c0_11 = arith.constant 0 : index
    %c0_12 = arith.constant 0 : index
    %12 = vector.load %arg7[%c0_10, %c0_11, %c0_12] : memref<4x8x1xf32, #tpu.memory_space<vmem>>, vector<1x8x1xf32>
    %13 = vector.shape_cast %12 : vector<1x8x1xf32> to vector<8x1xf32>
    %cst_13 = arith.constant dense<0xFF800000> : vector<8xf32>
    %14 = vector.multi_reduction <maximumf>, %11, %cst_13 [1] : vector<8x8xf32> to vector<8xf32>
    %15 = vector.shape_cast %14 : vector<8xf32> to vector<8x1xf32>
    %16 = arith.maximumf %13, %15 : vector<8x1xf32>
    %17 = arith.subf %13, %16 : vector<8x1xf32>
    %18 = math.exp %17 : vector<8x1xf32>
    %19 = vector.broadcast %16 : vector<8x1xf32> to vector<8x8xf32>
    %20 = arith.subf %11, %19 : vector<8x8xf32>
    %21 = math.exp %20 : vector<8x8xf32>
    %c0_14 = arith.constant 0 : index
    %c0_15 = arith.constant 0 : index
    %c0_16 = arith.constant 0 : index
    %22 = vector.load %arg8[%c0_14, %c0_15, %c0_16] : memref<4x8x1xf32, #tpu.memory_space<vmem>>, vector<1x8x1xf32>
    %23 = vector.shape_cast %22 : vector<1x8x1xf32> to vector<8x1xf32>
    %24 = arith.mulf %18, %23 : vector<8x1xf32>
    %cst_17 = arith.constant dense<0.000000e+00> : vector<8xf32>
    %25 = vector.multi_reduction <add>, %21, %cst_17 [1] : vector<8x8xf32> to vector<8xf32>
    %26 = vector.shape_cast %25 : vector<8xf32> to vector<8x1xf32>
    %27 = arith.addf %24, %26 : vector<8x1xf32>
    %c0_18 = arith.constant 0 : index
    %c0_19 = arith.constant 0 : index
    %c0_20 = arith.constant 0 : index
    %28 = vector.load %arg8[%c0_18, %c0_19, %c0_20] : memref<4x8x1xf32, #tpu.memory_space<vmem>>, vector<1x8x1xf32>
    %29 = vector.shape_cast %28 : vector<1x8x1xf32> to vector<8x1xf32>
    %30 = vector.shape_cast %27 : vector<8x1xf32> to vector<1x8x1xf32>
    tpu.vector_store %arg8[%c0_18, %c0_19, %c0_20], %30 {strides = array<i32>} : memref<4x8x1xf32, #tpu.memory_space<vmem>>, vector<1x8x1xf32>,
    %cst_21 = arith.constant dense<0.000000e+00> : vector<8x32xf32>
    %31 = tpu.matmul %21, %10, %cst_21 {dimension_numbers = #tpu.dot_dimension_numbers<[1], [0], [0], [1], [0, 0, 1, 1], [], []>} : vector<8x8xf32>, vector<8x32xf32>, vector<8x32xf32> -> vector<8x32xf32>
    %c0_22 = arith.constant 0 : index
    %c0_23 = arith.constant 0 : index
    %32 = vector.load %arg9[%c0_22, %c0_23] : memref<8x128xf32, #tpu.memory_space<vmem>>, vector<8x32xf32>
    %33 = vector.broadcast %18 : vector<8x1xf32> to vector<8x32xf32>
    %34 = arith.mulf %33, %32 : vector<8x32xf32>
    %35 = arith.addf %34, %31 : vector<8x32xf32>
    %c0_24 = arith.constant 0 : index
    %c0_25 = arith.constant 0 : index
    %36 = vector.load %arg9[%c0_24, %c0_25] : memref<8x128xf32, #tpu.memory_space<vmem>>, vector<8x32xf32>
    tpu.vector_store %arg9[%c0_24, %c0_25], %35 {strides = array<i32>} : memref<8x128xf32, #tpu.memory_space<vmem>>, vector<8x32xf32>,
    %c0_26 = arith.constant 0 : index
    %c0_27 = arith.constant 0 : index
    %c0_28 = arith.constant 0 : index
    %37 = vector.load %arg7[%c0_26, %c0_27, %c0_28] : memref<4x8x1xf32, #tpu.memory_space<vmem>>, vector<1x8x1xf32>
    %38 = vector.shape_cast %37 : vector<1x8x1xf32> to vector<8x1xf32>
    %39 = vector.shape_cast %16 : vector<8x1xf32> to vector<1x8x1xf32>
    tpu.vector_store %arg7[%c0_26, %c0_27, %c0_28], %39 {strides = array<i32>} : memref<4x8x1xf32, #tpu.memory_space<vmem>>, vector<1x8x1xf32>,
    %c0_29 = arith.constant 0 : index
    %c0_30 = arith.constant 0 : index
    %c32 = arith.constant 32 : index
    %40 = vector.load %arg3[%c0_29, %c0_30, %c32] : memref<1x8x128xf32, #tpu.memory_space<vmem>>, vector<1x8x32xf32>
    %41 = vector.shape_cast %40 : vector<1x8x32xf32> to vector<8x32xf32>
    %cst_31 = arith.constant 0.176776692 : f32
    %42 = vector.broadcast %cst_31 : f32 to vector<8x32xf32>
    %43 = arith.mulf %41, %42 : vector<8x32xf32>
    %c0_32 = arith.constant 0 : index
    %c0_33 = arith.constant 0 : index
    %c32_34 = arith.constant 32 : index
    %44 = vector.load %arg4[%c0_32, %c0_33, %c32_34] : memref<1x8x128xf32, #tpu.memory_space<vmem>>, vector<1x8x32xf32>
    %45 = vector.shape_cast %44 : vector<1x8x32xf32> to vector<8x32xf32>
    %c0_35 = arith.constant 0 : index
    %c0_36 = arith.constant 0 : index
    %c32_37 = arith.constant 32 : index
    %46 = vector.load %arg5[%c0_35, %c0_36, %c32_37] : memref<1x8x128xf32, #tpu.memory_space<vmem>>, vector<1x8x32xf32>
    %47 = vector.shape_cast %46 : vector<1x8x32xf32> to vector<8x32xf32>
    %cst_38 = arith.constant dense<0.000000e+00> : vector<8x8xf32>
    %48 = tpu.matmul %43, %45, %cst_38 {dimension_numbers = #tpu.dot_dimension_numbers<[1], [1], [0], [0], [0, 0, 1, 0], [], []>} : vector<8x32xf32>, vector<8x32xf32>, vector<8x8xf32> -> vector<8x8xf32>
    %c1 = arith.constant 1 : index
    %c0_39 = arith.constant 0 : index
    %c0_40 = arith.constant 0 : index
    %49 = vector.load %arg7[%c1, %c0_39, %c0_40] : memref<4x8x1xf32, #tpu.memory_space<vmem>>, vector<1x8x1xf32>
    %50 = vector.shape_cast %49 : vector<1x8x1xf32> to vector<8x1xf32>
    %cst_41 = arith.constant dense<0xFF800000> : vector<8xf32>
    %51 = vector.multi_reduction <maximumf>, %48, %cst_41 [1] : vector<8x8xf32> to vector<8xf32>
    %52 = vector.shape_cast %51 : vector<8xf32> to vector<8x1xf32>
    %53 = arith.maximumf %50, %52 : vector<8x1xf32>
    %54 = arith.subf %50, %53 : vector<8x1xf32>
    %55 = math.exp %54 : vector<8x1xf32>
    %56 = vector.broadcast %53 : vector<8x1xf32> to vector<8x8xf32>
    %57 = arith.subf %48, %56 : vector<8x8xf32>
    %58 = math.exp %57 : vector<8x8xf32>
    %c1_42 = arith.constant 1 : index
    %c0_43 = arith.constant 0 : index
    %c0_44 = arith.constant 0 : index
    %59 = vector.load %arg8[%c1_42, %c0_43, %c0_44] : memref<4x8x1xf32, #tpu.memory_space<vmem>>, vector<1x8x1xf32>
    %60 = vector.shape_cast %59 : vector<1x8x1xf32> to vector<8x1xf32>
    %61 = arith.mulf %55, %60 : vector<8x1xf32>
    %cst_45 = arith.constant dense<0.000000e+00> : vector<8xf32>
    %62 = vector.multi_reduction <add>, %58, %cst_45 [1] : vector<8x8xf32> to vector<8xf32>
    %63 = vector.shape_cast %62 : vector<8xf32> to vector<8x1xf32>
    %64 = arith.addf %61, %63 : vector<8x1xf32>
    %c1_46 = arith.constant 1 : index
    %c0_47 = arith.constant 0 : index
    %c0_48 = arith.constant 0 : index
    %65 = vector.load %arg8[%c1_46, %c0_47, %c0_48] : memref<4x8x1xf32, #tpu.memory_space<vmem>>, vector<1x8x1xf32>
    %66 = vector.shape_cast %65 : vector<1x8x1xf32> to vector<8x1xf32>
    %67 = vector.shape_cast %64 : vector<8x1xf32> to vector<1x8x1xf32>
    tpu.vector_store %arg8[%c1_46, %c0_47, %c0_48], %67 {strides = array<i32>} : memref<4x8x1xf32, #tpu.memory_space<vmem>>, vector<1x8x1xf32>,
    %cst_49 = arith.constant dense<0.000000e+00> : vector<8x32xf32>
    %68 = tpu.matmul %58, %47, %cst_49 {dimension_numbers = #tpu.dot_dimension_numbers<[1], [0], [0], [1], [0, 0, 1, 1], [], []>} : vector<8x8xf32>, vector<8x32xf32>, vector<8x32xf32> -> vector<8x32xf32>
    %c0_50 = arith.constant 0 : index
    %c32_51 = arith.constant 32 : index
    %69 = vector.load %arg9[%c0_50, %c32_51] : memref<8x128xf32, #tpu.memory_space<vmem>>, vector<8x32xf32>
    %70 = vector.broadcast %55 : vector<8x1xf32> to vector<8x32xf32>
    %71 = arith.mulf %70, %69 : vector<8x32xf32>
    %72 = arith.addf %71, %68 : vector<8x32xf32>
    %c0_52 = arith.constant 0 : index
    %c32_53 = arith.constant 32 : index
    %73 = vector.load %arg9[%c0_52, %c32_53] : memref<8x128xf32, #tpu.memory_space<vmem>>, vector<8x32xf32>
    tpu.vector_store %arg9[%c0_52, %c32_53], %72 {strides = array<i32>} : memref<8x128xf32, #tpu.memory_space<vmem>>, vector<8x32xf32>,
    %c1_54 = arith.constant 1 : index
    %c0_55 = arith.constant 0 : index
    %c0_56 = arith.constant 0 : index
    %74 = vector.load %arg7[%c1_54, %c0_55, %c0_56] : memref<4x8x1xf32, #tpu.memory_space<vmem>>, vector<1x8x1xf32>
    %75 = vector.shape_cast %74 : vector<1x8x1xf32> to vector<8x1xf32>
    %76 = vector.shape_cast %53 : vector<8x1xf32> to vector<1x8x1xf32>
    tpu.vector_store %arg7[%c1_54, %c0_55, %c0_56], %76 {strides = array<i32>} : memref<4x8x1xf32, #tpu.memory_space<vmem>>, vector<1x8x1xf32>,
    %c0_57 = arith.constant 0 : index
    %c0_58 = arith.constant 0 : index
    %c64 = arith.constant 64 : index
    %77 = vector.load %arg3[%c0_57, %c0_58, %c64] : memref<1x8x128xf32, #tpu.memory_space<vmem>>, vector<1x8x32xf32>
    %78 = vector.shape_cast %77 : vector<1x8x32xf32> to vector<8x32xf32>
    %cst_59 = arith.constant 0.176776692 : f32
    %79 = vector.broadcast %cst_59 : f32 to vector<8x32xf32>
    %80 = arith.mulf %78, %79 : vector<8x32xf32>
    %c0_60 = arith.constant 0 : index
    %c0_61 = arith.constant 0 : index
    %c64_62 = arith.constant 64 : index
    %81 = vector.load %arg4[%c0_60, %c0_61, %c64_62] : memref<1x8x128xf32, #tpu.memory_space<vmem>>, vector<1x8x32xf32>
    %82 = vector.shape_cast %81 : vector<1x8x32xf32> to vector<8x32xf32>
    %c0_63 = arith.constant 0 : index
    %c0_64 = arith.constant 0 : index
    %c64_65 = arith.constant 64 : index
    %83 = vector.load %arg5[%c0_63, %c0_64, %c64_65] : memref<1x8x128xf32, #tpu.memory_space<vmem>>, vector<1x8x32xf32>
    %84 = vector.shape_cast %83 : vector<1x8x32xf32> to vector<8x32xf32>
    %cst_66 = arith.constant dense<0.000000e+00> : vector<8x8xf32>
    %85 = tpu.matmul %80, %82, %cst_66 {dimension_numbers = #tpu.dot_dimension_numbers<[1], [1], [0], [0], [0, 0, 1, 0], [], []>} : vector<8x32xf32>, vector<8x32xf32>, vector<8x8xf32> -> vector<8x8xf32>
    %c2 = arith.constant 2 : index
    %c0_67 = arith.constant 0 : index
    %c0_68 = arith.constant 0 : index
    %86 = vector.load %arg7[%c2, %c0_67, %c0_68] : memref<4x8x1xf32, #tpu.memory_space<vmem>>, vector<1x8x1xf32>
    %87 = vector.shape_cast %86 : vector<1x8x1xf32> to vector<8x1xf32>
    %cst_69 = arith.constant dense<0xFF800000> : vector<8xf32>
    %88 = vector.multi_reduction <maximumf>, %85, %cst_69 [1] : vector<8x8xf32> to vector<8xf32>
    %89 = vector.shape_cast %88 : vector<8xf32> to vector<8x1xf32>
    %90 = arith.maximumf %87, %89 : vector<8x1xf32>
    %91 = arith.subf %87, %90 : vector<8x1xf32>
    %92 = math.exp %91 : vector<8x1xf32>
    %93 = vector.broadcast %90 : vector<8x1xf32> to vector<8x8xf32>
    %94 = arith.subf %85, %93 : vector<8x8xf32>
    %95 = math.exp %94 : vector<8x8xf32>
    %c2_70 = arith.constant 2 : index
    %c0_71 = arith.constant 0 : index
    %c0_72 = arith.constant 0 : index
    %96 = vector.load %arg8[%c2_70, %c0_71, %c0_72] : memref<4x8x1xf32, #tpu.memory_space<vmem>>, vector<1x8x1xf32>
    %97 = vector.shape_cast %96 : vector<1x8x1xf32> to vector<8x1xf32>
    %98 = arith.mulf %92, %97 : vector<8x1xf32>
    %cst_73 = arith.constant dense<0.000000e+00> : vector<8xf32>
    %99 = vector.multi_reduction <add>, %95, %cst_73 [1] : vector<8x8xf32> to vector<8xf32>
    %100 = vector.shape_cast %99 : vector<8xf32> to vector<8x1xf32>
    %101 = arith.addf %98, %100 : vector<8x1xf32>
    %c2_74 = arith.constant 2 : index
    %c0_75 = arith.constant 0 : index
    %c0_76 = arith.constant 0 : index
    %102 = vector.load %arg8[%c2_74, %c0_75, %c0_76] : memref<4x8x1xf32, #tpu.memory_space<vmem>>, vector<1x8x1xf32>
    %103 = vector.shape_cast %102 : vector<1x8x1xf32> to vector<8x1xf32>
    %104 = vector.shape_cast %101 : vector<8x1xf32> to vector<1x8x1xf32>
    tpu.vector_store %arg8[%c2_74, %c0_75, %c0_76], %104 {strides = array<i32>} : memref<4x8x1xf32, #tpu.memory_space<vmem>>, vector<1x8x1xf32>,
    %cst_77 = arith.constant dense<0.000000e+00> : vector<8x32xf32>
    %105 = tpu.matmul %95, %84, %cst_77 {dimension_numbers = #tpu.dot_dimension_numbers<[1], [0], [0], [1], [0, 0, 1, 1], [], []>} : vector<8x8xf32>, vector<8x32xf32>, vector<8x32xf32> -> vector<8x32xf32>
    %c0_78 = arith.constant 0 : index
    %c64_79 = arith.constant 64 : index
    %106 = vector.load %arg9[%c0_78, %c64_79] : memref<8x128xf32, #tpu.memory_space<vmem>>, vector<8x32xf32>
    %107 = vector.broadcast %92 : vector<8x1xf32> to vector<8x32xf32>
    %108 = arith.mulf %107, %106 : vector<8x32xf32>
    %109 = arith.addf %108, %105 : vector<8x32xf32>
    %c0_80 = arith.constant 0 : index
    %c64_81 = arith.constant 64 : index
    %110 = vector.load %arg9[%c0_80, %c64_81] : memref<8x128xf32, #tpu.memory_space<vmem>>, vector<8x32xf32>
    tpu.vector_store %arg9[%c0_80, %c64_81], %109 {strides = array<i32>} : memref<8x128xf32, #tpu.memory_space<vmem>>, vector<8x32xf32>,
    %c2_82 = arith.constant 2 : index
    %c0_83 = arith.constant 0 : index
    %c0_84 = arith.constant 0 : index
    %111 = vector.load %arg7[%c2_82, %c0_83, %c0_84] : memref<4x8x1xf32, #tpu.memory_space<vmem>>, vector<1x8x1xf32>
    %112 = vector.shape_cast %111 : vector<1x8x1xf32> to vector<8x1xf32>
    %113 = vector.shape_cast %90 : vector<8x1xf32> to vector<1x8x1xf32>
    tpu.vector_store %arg7[%c2_82, %c0_83, %c0_84], %113 {strides = array<i32>} : memref<4x8x1xf32, #tpu.memory_space<vmem>>, vector<1x8x1xf32>,
    %c0_85 = arith.constant 0 : index
    %c0_86 = arith.constant 0 : index
    %c96 = arith.constant 96 : index
    %114 = vector.load %arg3[%c0_85, %c0_86, %c96] : memref<1x8x128xf32, #tpu.memory_space<vmem>>, vector<1x8x32xf32>
    %115 = vector.shape_cast %114 : vector<1x8x32xf32> to vector<8x32xf32>
    %cst_87 = arith.constant 0.176776692 : f32
    %116 = vector.broadcast %cst_87 : f32 to vector<8x32xf32>
    %117 = arith.mulf %115, %116 : vector<8x32xf32>
    %c0_88 = arith.constant 0 : index
    %c0_89 = arith.constant 0 : index
    %c96_90 = arith.constant 96 : index
    %118 = vector.load %arg4[%c0_88, %c0_89, %c96_90] : memref<1x8x128xf32, #tpu.memory_space<vmem>>, vector<1x8x32xf32>
    %119 = vector.shape_cast %118 : vector<1x8x32xf32> to vector<8x32xf32>
    %c0_91 = arith.constant 0 : index
    %c0_92 = arith.constant 0 : index
    %c96_93 = arith.constant 96 : index
    %120 = vector.load %arg5[%c0_91, %c0_92, %c96_93] : memref<1x8x128xf32, #tpu.memory_space<vmem>>, vector<1x8x32xf32>
    %121 = vector.shape_cast %120 : vector<1x8x32xf32> to vector<8x32xf32>
    %cst_94 = arith.constant dense<0.000000e+00> : vector<8x8xf32>
    %122 = tpu.matmul %117, %119, %cst_94 {dimension_numbers = #tpu.dot_dimension_numbers<[1], [1], [0], [0], [0, 0, 1, 0], [], []>} : vector<8x32xf32>, vector<8x32xf32>, vector<8x8xf32> -> vector<8x8xf32>
    %c3 = arith.constant 3 : index
    %c0_95 = arith.constant 0 : index
    %c0_96 = arith.constant 0 : index
    %123 = vector.load %arg7[%c3, %c0_95, %c0_96] : memref<4x8x1xf32, #tpu.memory_space<vmem>>, vector<1x8x1xf32>
    %124 = vector.shape_cast %123 : vector<1x8x1xf32> to vector<8x1xf32>
    %cst_97 = arith.constant dense<0xFF800000> : vector<8xf32>
    %125 = vector.multi_reduction <maximumf>, %122, %cst_97 [1] : vector<8x8xf32> to vector<8xf32>
    %126 = vector.shape_cast %125 : vector<8xf32> to vector<8x1xf32>
    %127 = arith.maximumf %124, %126 : vector<8x1xf32>
    %128 = arith.subf %124, %127 : vector<8x1xf32>
    %129 = math.exp %128 : vector<8x1xf32>
    %130 = vector.broadcast %127 : vector<8x1xf32> to vector<8x8xf32>
    %131 = arith.subf %122, %130 : vector<8x8xf32>
    %132 = math.exp %131 : vector<8x8xf32>
    %c3_98 = arith.constant 3 : index
    %c0_99 = arith.constant 0 : index
    %c0_100 = arith.constant 0 : index
    %133 = vector.load %arg8[%c3_98, %c0_99, %c0_100] : memref<4x8x1xf32, #tpu.memory_space<vmem>>, vector<1x8x1xf32>
    %134 = vector.shape_cast %133 : vector<1x8x1xf32> to vector<8x1xf32>
    %135 = arith.mulf %129, %134 : vector<8x1xf32>
    %cst_101 = arith.constant dense<0.000000e+00> : vector<8xf32>
    %136 = vector.multi_reduction <add>, %132, %cst_101 [1] : vector<8x8xf32> to vector<8xf32>
    %137 = vector.shape_cast %136 : vector<8xf32> to vector<8x1xf32>
    %138 = arith.addf %135, %137 : vector<8x1xf32>
    %c3_102 = arith.constant 3 : index
    %c0_103 = arith.constant 0 : index
    %c0_104 = arith.constant 0 : index
    %139 = vector.load %arg8[%c3_102, %c0_103, %c0_104] : memref<4x8x1xf32, #tpu.memory_space<vmem>>, vector<1x8x1xf32>
    %140 = vector.shape_cast %139 : vector<1x8x1xf32> to vector<8x1xf32>
    %141 = vector.shape_cast %138 : vector<8x1xf32> to vector<1x8x1xf32>
    tpu.vector_store %arg8[%c3_102, %c0_103, %c0_104], %141 {strides = array<i32>} : memref<4x8x1xf32, #tpu.memory_space<vmem>>, vector<1x8x1xf32>,
    %cst_105 = arith.constant dense<0.000000e+00> : vector<8x32xf32>
    %142 = tpu.matmul %132, %121, %cst_105 {dimension_numbers = #tpu.dot_dimension_numbers<[1], [0], [0], [1], [0, 0, 1, 1], [], []>} : vector<8x8xf32>, vector<8x32xf32>, vector<8x32xf32> -> vector<8x32xf32>
    %c0_106 = arith.constant 0 : index
    %c96_107 = arith.constant 96 : index
    %143 = vector.load %arg9[%c0_106, %c96_107] : memref<8x128xf32, #tpu.memory_space<vmem>>, vector<8x32xf32>
    %144 = vector.broadcast %129 : vector<8x1xf32> to vector<8x32xf32>
    %145 = arith.mulf %144, %143 : vector<8x32xf32>
    %146 = arith.addf %145, %142 : vector<8x32xf32>
    %c0_108 = arith.constant 0 : index
    %c96_109 = arith.constant 96 : index
    %147 = vector.load %arg9[%c0_108, %c96_109] : memref<8x128xf32, #tpu.memory_space<vmem>>, vector<8x32xf32>
    tpu.vector_store %arg9[%c0_108, %c96_109], %146 {strides = array<i32>} : memref<8x128xf32, #tpu.memory_space<vmem>>, vector<8x32xf32>,
    %c3_110 = arith.constant 3 : index
    %c0_111 = arith.constant 0 : index
    %c0_112 = arith.constant 0 : index
    %148 = vector.load %arg7[%c3_110, %c0_111, %c0_112] : memref<4x8x1xf32, #tpu.memory_space<vmem>>, vector<1x8x1xf32>
    %149 = vector.shape_cast %148 : vector<1x8x1xf32> to vector<8x1xf32>
    %150 = vector.shape_cast %127 : vector<8x1xf32> to vector<1x8x1xf32>
    tpu.vector_store %arg7[%c3_110, %c0_111, %c0_112], %150 {strides = array<i32>} : memref<4x8x1xf32, #tpu.memory_space<vmem>>, vector<1x8x1xf32>,
    %c0_i32_113 = arith.constant 0 : i32
    %151 = arith.cmpi eq, %arg2, %c0_i32_113 : i32
    %152 = arith.extui %151 : i1 to i32
    %c0_i32_114 = arith.constant 0 : i32
    %153 = arith.cmpi ne, %152, %c0_i32_114 : i32
    scf.if %153 {
      %c0_115 = arith.constant 0 : index
      %c0_116 = arith.constant 0 : index
      %c0_117 = arith.constant 0 : index
      %154 = vector.load %arg8[%c0_115, %c0_116, %c0_117] : memref<4x8x1xf32, #tpu.memory_space<vmem>>, vector<1x8x1xf32>
      %155 = vector.shape_cast %154 : vector<1x8x1xf32> to vector<8x1xf32>
      %156 = tpu.reciprocal %155 : vector<8x1xf32> -> vector<8x1xf32>
      %c0_118 = arith.constant 0 : index
      %c0_119 = arith.constant 0 : index
      %157 = vector.load %arg9[%c0_118, %c0_119] : memref<8x128xf32, #tpu.memory_space<vmem>>, vector<8x32xf32>
      %158 = vector.broadcast %156 : vector<8x1xf32> to vector<8x32xf32>
      %159 = arith.mulf %157, %158 : vector<8x32xf32>
      %c0_120 = arith.constant 0 : index
      %c0_121 = arith.constant 0 : index
      %160 = vector.load %arg9[%c0_120, %c0_121] : memref<8x128xf32, #tpu.memory_space<vmem>>, vector<8x32xf32>
      tpu.vector_store %arg9[%c0_120, %c0_121], %159 {strides = array<i32>} : memref<8x128xf32, #tpu.memory_space<vmem>>, vector<8x32xf32>,
      %c1_122 = arith.constant 1 : index
      %c0_123 = arith.constant 0 : index
      %c0_124 = arith.constant 0 : index
      %161 = vector.load %arg8[%c1_122, %c0_123, %c0_124] : memref<4x8x1xf32, #tpu.memory_space<vmem>>, vector<1x8x1xf32>
      %162 = vector.shape_cast %161 : vector<1x8x1xf32> to vector<8x1xf32>
      %163 = tpu.reciprocal %162 : vector<8x1xf32> -> vector<8x1xf32>
      %c0_125 = arith.constant 0 : index
      %c32_126 = arith.constant 32 : index
      %164 = vector.load %arg9[%c0_125, %c32_126] : memref<8x128xf32, #tpu.memory_space<vmem>>, vector<8x32xf32>
      %165 = vector.broadcast %163 : vector<8x1xf32> to vector<8x32xf32>
      %166 = arith.mulf %164, %165 : vector<8x32xf32>
      %c0_127 = arith.constant 0 : index
      %c32_128 = arith.constant 32 : index
      %167 = vector.load %arg9[%c0_127, %c32_128] : memref<8x128xf32, #tpu.memory_space<vmem>>, vector<8x32xf32>
      tpu.vector_store %arg9[%c0_127, %c32_128], %166 {strides = array<i32>} : memref<8x128xf32, #tpu.memory_space<vmem>>, vector<8x32xf32>,
      %c2_129 = arith.constant 2 : index
      %c0_130 = arith.constant 0 : index
      %c0_131 = arith.constant 0 : index
      %168 = vector.load %arg8[%c2_129, %c0_130, %c0_131] : memref<4x8x1xf32, #tpu.memory_space<vmem>>, vector<1x8x1xf32>
      %169 = vector.shape_cast %168 : vector<1x8x1xf32> to vector<8x1xf32>
      %170 = tpu.reciprocal %169 : vector<8x1xf32> -> vector<8x1xf32>
      %c0_132 = arith.constant 0 : index
      %c64_133 = arith.constant 64 : index
      %171 = vector.load %arg9[%c0_132, %c64_133] : memref<8x128xf32, #tpu.memory_space<vmem>>, vector<8x32xf32>
      %172 = vector.broadcast %170 : vector<8x1xf32> to vector<8x32xf32>
      %173 = arith.mulf %171, %172 : vector<8x32xf32>
      %c0_134 = arith.constant 0 : index
      %c64_135 = arith.constant 64 : index
      %174 = vector.load %arg9[%c0_134, %c64_135] : memref<8x128xf32, #tpu.memory_space<vmem>>, vector<8x32xf32>
      tpu.vector_store %arg9[%c0_134, %c64_135], %173 {strides = array<i32>} : memref<8x128xf32, #tpu.memory_space<vmem>>, vector<8x32xf32>,
      %c3_136 = arith.constant 3 : index
      %c0_137 = arith.constant 0 : index
      %c0_138 = arith.constant 0 : index
      %175 = vector.load %arg8[%c3_136, %c0_137, %c0_138] : memref<4x8x1xf32, #tpu.memory_space<vmem>>, vector<1x8x1xf32>
      %176 = vector.shape_cast %175 : vector<1x8x1xf32> to vector<8x1xf32>
      %177 = tpu.reciprocal %176 : vector<8x1xf32> -> vector<8x1xf32>
      %c0_139 = arith.constant 0 : index
      %c96_140 = arith.constant 96 : index
      %178 = vector.load %arg9[%c0_139, %c96_140] : memref<8x128xf32, #tpu.memory_space<vmem>>, vector<8x32xf32>
      %179 = vector.broadcast %177 : vector<8x1xf32> to vector<8x32xf32>
      %180 = arith.mulf %178, %179 : vector<8x32xf32>
      %c0_141 = arith.constant 0 : index
      %c96_142 = arith.constant 96 : index
      %181 = vector.load %arg9[%c0_141, %c96_142] : memref<8x128xf32, #tpu.memory_space<vmem>>, vector<8x32xf32>
      tpu.vector_store %arg9[%c0_141, %c96_142], %180 {strides = array<i32>} : memref<8x128xf32, #tpu.memory_space<vmem>>, vector<8x32xf32>,
      %c0_143 = arith.constant 0 : index
      %c0_144 = arith.constant 0 : index
      %182 = vector.load %arg9[%c0_143, %c0_144] : memref<8x128xf32, #tpu.memory_space<vmem>>, vector<8x128xf32>
      %c0_145 = arith.constant 0 : index
      %c0_146 = arith.constant 0 : index
      %c0_147 = arith.constant 0 : index
      %183 = vector.load %arg6[%c0_145, %c0_146, %c0_147] : memref<1x8x128xf32, #tpu.memory_space<vmem>>, vector<1x8x128xf32>
      %184 = vector.shape_cast %183 : vector<1x8x128xf32> to vector<8x128xf32>
      %185 = vector.shape_cast %182 : vector<8x128xf32> to vector<1x8x128xf32>
      tpu.vector_store %arg6[%c0_145, %c0_146, %c0_147], %185 {strides = array<i32>} : memref<1x8x128xf32, #tpu.memory_space<vmem>>, vector<1x8x128xf32>,
    } else {
    }
    return
  }
  func.func @transform_0(%arg0: i32, %arg1: i32, %arg2: i32) -> (i32, i32, i32) {
    %c0_i32 = arith.constant 0 : i32
    %c0_i32_0 = arith.constant 0 : i32
    return %arg0, %arg1, %c0_i32 : i32, i32, i32
  }
  func.func @transform_1(%arg0: i32, %arg1: i32, %arg2: i32) -> (i32, i32, i32) {
    %c1_i32 = arith.constant 1 : i32
    %c0_i32 = arith.constant 0 : i32
    return %arg0, %arg2, %c1_i32 : i32, i32, i32
  }
  func.func @transform_2(%arg0: i32, %arg1: i32, %arg2: i32) -> (i32, i32, i32) {
    %c2_i32 = arith.constant 2 : i32
    %c0_i32 = arith.constant 0 : i32
    return %arg0, %arg2, %c2_i32 : i32, i32, i32
  }
  func.func @transform_3(%arg0: i32, %arg1: i32, %arg2: i32) -> (i32, i32, i32) {
    %c0_i32 = arith.constant 0 : i32
    %c0_i32_0 = arith.constant 0 : i32
    return %arg0, %arg1, %c0_i32 : i32, i32, i32
  }
}

</mosaic_0001>

<llo_original>
// kernel: multi_head_attention.5
$region0: #{multi_head_attention.5}
  #allocation0 [shape = 'u32[]', space=smem, size = 0x4, offset = 0x4, fixed_abs, tag = 'smem constant byte address 0x4 - core index']
  #allocation1 [shape = 'u32[144,128]{1,0:T(1,128)}', space=vmem, size = 0x12000, scoped, tag = 'internal scratch']
  #allocation2 [shape = 'f32[16,128]{1,0:T(8,128)}', space=vmem, size = 0x2000, scoped, tag = 'scratch operand']
  %s0 = inlined_call_operand.vmem [shape: f32[16,128], index: 0, kind: input, shape index: {}]
  %s1 = inlined_call_operand.vmem [shape: f32[128,128], index: 1, kind: input, shape index: {}]
  %s2 = inlined_call_operand.vmem [shape: f32[1,128], index: 2, kind: input, shape index: {}]
  %s3 = inlined_call_operand.hbm [shape: f32[16,128], index: 3, kind: output, shape index: {}]
  %s4 = sld [smem:[#allocation0]]
  $region30: #{multi_head_attention.5} parent=0
    _
  %s6 = ssub.s32 1, %s4
  %s7 = scalar_select 0, %s6, %s4
  $region1: #{multi_head_attention.5} parent=0
    #allocation3 [shape = 'u8[8192]{0}', space=vmem, size = 0x2000, scoped, tag = 'output window, operand 0, single buffered']
    #allocation4 [shape = 's32[1]{0}', space=sflag, size = 0x4, scoped, tag = 'scoped memory for multi_head_attention.5']
    %8 = vsyncpa [#allocation4], 0
    // Predicated region
    $region2: #{multi_head_attention.5} parent=1 // pred_check
      _
    $region3: #{multi_head_attention.5} parent=1 // pred_check_branch
      %10 = sbr.rel (0) target = $region5
    $region4: #{multi_head_attention.5} parent=1 // pred_region
      _
    $region5: #{multi_head_attention.5} parent=1 // pred_fallthru
      _
    // Predicated region
    $region6: #{multi_head_attention.5} parent=1 // pred_check
      _
    $region7: #{multi_head_attention.5} parent=1 // pred_check_branch
      %12 = sbr.rel (0) target = $region9
    $region8: #{multi_head_attention.5} parent=1 // pred_region
      _
    $region9: #{multi_head_attention.5} parent=1 // pred_fallthru
      _
    // Predicated region
    $region10: #{multi_head_attention.5} parent=1 // pred_check
      _
    $region11: #{multi_head_attention.5} parent=1 // pred_check_branch
      %14 = sbr.rel (0) target = $region13
    $region12: #{multi_head_attention.5} parent=1 // pred_region
      _
    $region13: #{multi_head_attention.5} parent=1 // pred_fallthru
      _
    %p15 = scmp.eq.s32.totalorder 0, 0
    // Predicated region
    $region14: #{multi_head_attention.5} parent=1 // pred_check
      %p16 = pneg %p15
    $region15: #{multi_head_attention.5} parent=1 // pred_check_branch
      %18 = sbr.rel (%p16) target = $region17
    $region16: #{multi_head_attention.5} parent=1 // pred_region
      %19 = vst [vmem:[#allocation2] sm:$0xff] 0.0
      %20 = vst [vmem:[#allocation2 + $0x8] sm:$0xff] 0.0
    $region17: #{multi_head_attention.5} parent=1 // pred_fallthru
      _
    %v21 = vld [vmem:[#allocation2] sm:$0xff]
    %v22 = vld [vmem:[#allocation2 + $0x8] sm:$0xff]
    %v23 = vld [vmem:[%s0] sm:$0xff]
    %v24 = vld [vmem:[%s0 + $0x8] sm:$0xff]
    %v25 = vld [vmem:[%s1] sm:$0xff]
    %v26 = vld [vmem:[%s1 + $0x8] sm:$0xff]
    %v27 = vld [vmem:[%s1 + $0x10] sm:$0xff]
    %v28 = vld [vmem:[%s1 + $0x18] sm:$0xff]
    %v29 = vld [vmem:[%s1 + $0x20] sm:$0xff]
    %v30 = vld [vmem:[%s1 + $0x28] sm:$0xff]
    %v31 = vld [vmem:[%s1 + $0x30] sm:$0xff]
    %v32 = vld [vmem:[%s1 + $0x38] sm:$0xff]
    %v33 = vld [vmem:[%s1 + $0x40] sm:$0xff]
    %v34 = vld [vmem:[%s1 + $0x48] sm:$0xff]
    %v35 = vld [vmem:[%s1 + $0x50] sm:$0xff]
    %v36 = vld [vmem:[%s1 + $0x58] sm:$0xff]
    %v37 = vld [vmem:[%s1 + $0x60] sm:$0xff]
    %v38 = vld [vmem:[%s1 + $0x68] sm:$0xff]
    %v39 = vld [vmem:[%s1 + $0x70] sm:$0xff]
    %v40 = vld [vmem:[%s1 + $0x78] sm:$0xff]
    %41 = vmatprep.subr.mxu0 0.0
    %42 = vmatpush1.msra.mxu0 %v40
    %43 = vmatprep.subr.mxu0 0.0
    %44 = vmatpush1.msra.mxu0 %v39
    %45 = vmatprep.subr.mxu0 0.0
    %46 = vmatpush1.msra.mxu0 %v38
    %47 = vmatprep.subr.mxu0 0.0
    %48 = vmatpush1.msra.mxu0 %v37
    %49 = vmatprep.subr.mxu0 0.0
    %50 = vmatpush1.msra.mxu0 %v36
    %51 = vmatprep.subr.mxu0 0.0
    %52 = vmatpush1.msra.mxu0 %v35
    %53 = vmatprep.subr.mxu0 0.0
    %54 = vmatpush1.msra.mxu0 %v34
    %55 = vmatprep.subr.mxu0 0.0
    %56 = vmatpush1.msra.mxu0 %v33
    %57 = vmatprep.subr.mxu0 0.0
    %58 = vmatpush1.msra.mxu0 %v32
    %59 = vmatprep.subr.mxu0 0.0
    %60 = vmatpush1.msra.mxu0 %v31
    %61 = vmatprep.subr.mxu0 0.0
    %62 = vmatpush1.msra.mxu0 %v30
    %63 = vmatprep.subr.mxu0 0.0
    %64 = vmatpush1.msra.mxu0 %v29
    %65 = vmatprep.subr.mxu0 0.0
    %66 = vmatpush1.msra.mxu0 %v28
    %67 = vmatprep.subr.mxu0 0.0
    %68 = vmatpush1.msra.mxu0 %v27
    %69 = vmatprep.subr.mxu0 0.0
    %70 = vmatpush1.msra.mxu0 %v26
    %71 = vmatprep.subr.mxu0 0.0
    %72 = vmatpush1.msra.mxu0 %v25
    %73 = vmatprep.subr.mxu0 0.0
    %74 = vmatpush2.msra.mxu0 0.0
    %75 = vmatprep.subr.mxu0 0.0
    %76 = vmatpush2.msra.mxu0 0.0
    %77 = vmatprep.subr.mxu0 0.0
    %78 = vmatpush2.msra.mxu0 0.0
    %79 = vmatprep.subr.mxu0 0.0
    %80 = vmatpush2.msra.mxu0 0.0
    %81 = vmatprep.subr.mxu0 0.0
    %82 = vmatpush2.msra.mxu0 0.0
    %83 = vmatprep.subr.mxu0 0.0
    %84 = vmatpush2.msra.mxu0 0.0
    %85 = vmatprep.subr.mxu0 0.0
    %86 = vmatpush2.msra.mxu0 0.0
    %87 = vmatprep.subr.mxu0 0.0
    %88 = vmatpush2.msra.mxu0 0.0
    %89 = vmatprep.subr.mxu0 0.0
    %90 = vmatpush2.msra.mxu0 0.0
    %91 = vmatprep.subr.mxu0 0.0
    %92 = vmatpush2.msra.mxu0 0.0
    %93 = vmatprep.subr.mxu0 0.0
    %94 = vmatpush2.msra.mxu0 0.0
    %95 = vmatprep.subr.mxu0 0.0
    %96 = vmatpush2.msra.mxu0 0.0
    %97 = vmatprep.subr.mxu0 0.0
    %98 = vmatpush2.msra.mxu0 0.0
    %99 = vmatprep.subr.mxu0 0.0
    %100 = vmatpush2.msra.mxu0 0.0
    %101 = vmatprep.subr.mxu0 0.0
    %102 = vmatpush2.msra.mxu0 0.0
    %103 = vmatprep.subr.mxu0 0.0
    %104 = vmatpush2.msra.mxu0 0.0
    %105 = vmatprep.mubr.f32.mxu0 0.0
    %106 = vmatmul.mubr.f32.gmra.mxu0 %v23
    %v107 = vpop.f32.mrf.mxu0
    %v108 = vadd.f32 0.0, %v107
    %v109 = vpop.f32.mrf.mxu0
    %110 = vmatprep.mubr.f32.mxu0 0.0
    %111 = vmatmul.mubr.f32.gmra.mxu0 %v24
    %v112 = vpop.f32.mrf.mxu0
    %v113 = vadd.f32 0.0, %v112
    %v114 = vpop.f32.mrf.mxu0
    %115 = vdwg.mxu0
    %v116 = vadd.f32 %v21, %v108
    %v117 = vadd.f32 %v22, %v113
    %118 = vst [vmem:[#allocation2] sm:$0xff] %v116
    %119 = vst [vmem:[#allocation2 + $0x8] sm:$0xff] %v117
    // Predicated region
    $region18: #{multi_head_attention.5} parent=1 // pred_check
      %p120 = pneg %p15
    $region19: #{multi_head_attention.5} parent=1 // pred_check_branch
      %122 = sbr.rel (%p120) target = $region21
    $region20: #{multi_head_attention.5} parent=1 // pred_region
      %v123 = vld [vmem:[#allocation2] sm:$0xff]
      %v124 = vld [vmem:[#allocation2 + $0x8] sm:$0xff]
      %v125 = vld [vmem:[%s2] sm:$0x1]
      %v127 = vlaneseq
      %v128 = vshrl.u32 %v127, 7
      %v129 = vsub.s32 0, %v128
      %v130 = vrot.slane %v125, %v129
      %v132 = vadd.f32 %v123, %v130
      %v133 = vadd.f32 %v124, %v130
      %134 = vst [vmem:[#allocation3] sm:$0xff] %v132
      %135 = vst [vmem:[#allocation3 + $0x8] sm:$0xff] %v133
    $region21: #{multi_head_attention.5} parent=1 // pred_fallthru
      _
    // Predicated region
    $region22: #{multi_head_attention.5} parent=1 // pred_check
      _
    $region23: #{multi_head_attention.5} parent=1 // pred_check_branch
      %137 = sbr.rel (0) target = $region25
    $region24: #{multi_head_attention.5} parent=1 // pred_region
      %s139 = ssub.s32 256, 256
      %140 = vsyncadd [#allocation4], %s139
      %s141 = sshll.u32 [#allocation3], 4
      %s142 = int_to_ptr.vmem [resolvable:$true] %s141
      %147 = dma.vmem_to_hbm [thread:$0]  %s142, 256, %s3, [#allocation4], 128, 128, 8
    $region25: #{multi_head_attention.5} parent=1 // pred_fallthru
      _
    // Predicated region
    $region26: #{multi_head_attention.5} parent=1 // pred_check
      _
    $region27: #{multi_head_attention.5} parent=1 // pred_check_branch
      %149 = sbr.rel (0) target = $region29
    $region28: #{multi_head_attention.5} parent=1 // pred_region
      %150 = dma.done [#allocation4], 256
    $region29: #{multi_head_attention.5} parent=1 // pred_fallthru
      _
    %151 = vsyncpa [#allocation4], 1

// kernel: multi_head_attention.3
$region0: #{multi_head_attention.3}
  #allocation0 [shape = 'u32[]', space=smem, size = 0x4, offset = 0x4, fixed_abs, tag = 'smem constant byte address 0x4 - core index']
  #allocation1 [shape = 'u32[144,128]{1,0:T(1,128)}', space=vmem, size = 0x12000, scoped, tag = 'internal scratch']
  #allocation2 [shape = 'f32[16,384]{1,0:T(8,128)}', space=vmem, size = 0x6000, scoped, tag = 'scratch operand']
  %s0 = inlined_call_operand.hbm [shape: f32[16,128], index: 0, kind: input, shape index: {}]
  %s1 = inlined_call_operand.hbm [shape: f32[128,384], index: 1, kind: input, shape index: {}]
  %s2 = inlined_call_operand.vmem [shape: f32[1,384], index: 2, kind: input, shape index: {}]
  %s3 = inlined_call_operand.vmem [shape: f32[16,384], index: 3, kind: output, shape index: {}]
  %s4 = sld [smem:[#allocation0]]
  $region38: #{multi_head_attention.3} parent=0
    _
  %s6 = ssub.s32 1, %s4
  %s7 = scalar_select 0, %s6, %s4
  $region1: #{multi_head_attention.3} parent=0
    #allocation3 [shape = 'u8[8192]{0}', space=vmem, size = 0x2000, scoped, tag = 'input window, operand 0, single buffered']
    #allocation4 [shape = 's32[1]{0}', space=sflag, size = 0x4, scoped, tag = 'scoped memory for multi_head_attention.3']
    #allocation5 [shape = 'u8[196608]{0}', space=vmem, size = 0x30000, scoped, tag = 'input window, operand 1, single buffered']
    #allocation6 [shape = 's32[1]{0}', space=sflag, size = 0x4, scoped, tag = 'scoped memory for multi_head_attention.3']
    %8 = vsyncpa [#allocation4], 0
    %9 = vsyncpa [#allocation6], 0
    // Predicated region
    $region2: #{multi_head_attention.3} parent=1 // pred_check
      _
    $region3: #{multi_head_attention.3} parent=1 // pred_check_branch
      %11 = sbr.rel (0) target = $region5
    $region4: #{multi_head_attention.3} parent=1 // pred_region
      %s13 = ssub.s32 256, 256
      %14 = vsyncadd [#allocation4], %s13
      %s15 = sshll.u32 [#allocation3], 4
      %s16 = int_to_ptr.vmem [resolvable:$true] %s15
      %21 = dma.hbm_to_vmem [thread:$0]  %s0, 256, %s16, [#allocation4], 128, 128, 8
    $region5: #{multi_head_attention.3} parent=1 // pred_fallthru
      _
    // Predicated region
    $region6: #{multi_head_attention.3} parent=1 // pred_check
      _
    $region7: #{multi_head_attention.3} parent=1 // pred_check_branch
      %23 = sbr.rel (0) target = $region9
    $region8: #{multi_head_attention.3} parent=1 // pred_region
      %s25 = ssub.s32 6144, 6144
      %26 = vsyncadd [#allocation6], %s25
      %s27 = sshll.u32 [#allocation5], 4
      %s28 = int_to_ptr.vmem [resolvable:$true] %s27
      %33 = dma.hbm_to_vmem [thread:$0]  %s1, 6144, %s28, [#allocation6], 384, 384, 24
    $region9: #{multi_head_attention.3} parent=1 // pred_fallthru
      _
    // Predicated region
    $region10: #{multi_head_attention.3} parent=1 // pred_check
      _
    $region11: #{multi_head_attention.3} parent=1 // pred_check_branch
      %35 = sbr.rel (0) target = $region13
    $region12: #{multi_head_attention.3} parent=1 // pred_region
      _
    $region13: #{multi_head_attention.3} parent=1 // pred_fallthru
      _
    // Predicated region
    $region14: #{multi_head_attention.3} parent=1 // pred_check
      _
    $region15: #{multi_head_attention.3} parent=1 // pred_check_branch
      %37 = sbr.rel (0) target = $region17
    $region16: #{multi_head_attention.3} parent=1 // pred_region
      %38 = dma.done [#allocation4], 256
    $region17: #{multi_head_attention.3} parent=1 // pred_fallthru
      _
    // Predicated region
    $region18: #{multi_head_attention.3} parent=1 // pred_check
      _
    $region19: #{multi_head_attention.3} parent=1 // pred_check_branch
      %40 = sbr.rel (0) target = $region21
    $region20: #{multi_head_attention.3} parent=1 // pred_region
      %41 = dma.done [#allocation6], 6144
    $region21: #{multi_head_attention.3} parent=1 // pred_fallthru
      _
    %p42 = scmp.eq.s32.totalorder 0, 0
    // Predicated region
    $region22: #{multi_head_attention.3} parent=1 // pred_check
      %p43 = pneg %p42
    $region23: #{multi_head_attention.3} parent=1 // pred_check_branch
      %45 = sbr.rel (%p43) target = $region25
    $region24: #{multi_head_attention.3} parent=1 // pred_region
      %46 = vst [vmem:[#allocation2] sm:$0xff] 0.0
      %47 = vst [vmem:[#allocation2 + $0x8] sm:$0xff] 0.0
      %48 = vst [vmem:[#allocation2 + $0x10] sm:$0xff] 0.0
      %49 = vst [vmem:[#allocation2 + $0x18] sm:$0xff] 0.0
      %50 = vst [vmem:[#allocation2 + $0x20] sm:$0xff] 0.0
      %51 = vst [vmem:[#allocation2 + $0x28] sm:$0xff] 0.0
    $region25: #{multi_head_attention.3} parent=1 // pred_fallthru
      _
    %v52 = vld [vmem:[#allocation2] sm:$0xff]
    %v53 = vld [vmem:[#allocation2 + $0x8] sm:$0xff]
    %v54 = vld [vmem:[#allocation2 + $0x10] sm:$0xff]
    %v55 = vld [vmem:[#allocation2 + $0x18] sm:$0xff]
    %v56 = vld [vmem:[#allocation2 + $0x20] sm:$0xff]
    %v57 = vld [vmem:[#allocation2 + $0x28] sm:$0xff]
    %v58 = vld [vmem:[#allocation3] sm:$0xff]
    %v59 = vld [vmem:[#allocation3 + $0x8] sm:$0xff]
    %v60 = vld [vmem:[#allocation5] sm:$0xff]
    %v61 = vld [vmem:[#allocation5 + $0x8] sm:$0xff]
    %v62 = vld [vmem:[#allocation5 + $0x10] sm:$0xff]
    %v63 = vld [vmem:[#allocation5 + $0x18] sm:$0xff]
    %v64 = vld [vmem:[#allocation5 + $0x20] sm:$0xff]
    %v65 = vld [vmem:[#allocation5 + $0x28] sm:$0xff]
    %v66 = vld [vmem:[#allocation5 + $0x30] sm:$0xff]
    %v67 = vld [vmem:[#allocation5 + $0x38] sm:$0xff]
    %v68 = vld [vmem:[#allocation5 + $0x40] sm:$0xff]
    %v69 = vld [vmem:[#allocation5 + $0x48] sm:$0xff]
    %v70 = vld [vmem:[#allocation5 + $0x50] sm:$0xff]
    %v71 = vld [vmem:[#allocation5 + $0x58] sm:$0xff]
    %v72 = vld [vmem:[#allocation5 + $0x60] sm:$0xff]
    %v73 = vld [vmem:[#allocation5 + $0x68] sm:$0xff]
    %v74 = vld [vmem:[#allocation5 + $0x70] sm:$0xff]
    %v75 = vld [vmem:[#allocation5 + $0x78] sm:$0xff]
    %v76 = vld [vmem:[#allocation5 + $0x80] sm:$0xff]
    %v77 = vld [vmem:[#allocation5 + $0x88] sm:$0xff]
    %v78 = vld [vmem:[#allocation5 + $0x90] sm:$0xff]
    %v79 = vld [vmem:[#allocation5 + $0x98] sm:$0xff]
    %v80 = vld [vmem:[#allocation5 + $0xa0] sm:$0xff]
    %v81 = vld [vmem:[#allocation5 + $0xa8] sm:$0xff]
    %v82 = vld [vmem:[#allocation5 + $0xb0] sm:$0xff]
    %v83 = vld [vmem:[#allocation5 + $0xb8] sm:$0xff]
    %v84 = vld [vmem:[#allocation5 + $0xc0] sm:$0xff]
    %v85 = vld [vmem:[#allocation5 + $0xc8] sm:$0xff]
    %v86 = vld [vmem:[#allocation5 + $0xd0] sm:$0xff]
    %v87 = vld [vmem:[#allocation5 + $0xd8] sm:$0xff]
    %v88 = vld [vmem:[#allocation5 + $0xe0] sm:$0xff]
    %v89 = vld [vmem:[#allocation5 + $0xe8] sm:$0xff]
    %v90 = vld [vmem:[#allocation5 + $0xf0] sm:$0xff]
    %v91 = vld [vmem:[#allocation5 + $0xf8] sm:$0xff]
    %v92 = vld [vmem:[#allocation5 + $0x100] sm:$0xff]
    %v93 = vld [vmem:[#allocation5 + $0x108] sm:$0xff]
    %v94 = vld [vmem:[#allocation5 + $0x110] sm:$0xff]
    %v95 = vld [vmem:[#allocation5 + $0x118] sm:$0xff]
    %v96 = vld [vmem:[#allocation5 + $0x120] sm:$0xff]
    %v97 = vld [vmem:[#allocation5 + $0x128] sm:$0xff]
    %v98 = vld [vmem:[#allocation5 + $0x130] sm:$0xff]
    %v99 = vld [vmem:[#allocation5 + $0x138] sm:$0xff]
    %v100 = vld [vmem:[#allocation5 + $0x140] sm:$0xff]
    %v101 = vld [vmem:[#allocation5 + $0x148] sm:$0xff]
    %v102 = vld [vmem:[#allocation5 + $0x150] sm:$0xff]
    %v103 = vld [vmem:[#allocation5 + $0x158] sm:$0xff]
    %v104 = vld [vmem:[#allocation5 + $0x160] sm:$0xff]
    %v105 = vld [vmem:[#allocation5 + $0x168] sm:$0xff]
    %v106 = vld [vmem:[#allocation5 + $0x170] sm:$0xff]
    %v107 = vld [vmem:[#allocation5 + $0x178] sm:$0xff]
    %108 = vmatprep.subr.mxu0 %v106
    %109 = vmatpush1.msra.mxu0 %v105
    %110 = vmatprep.subr.mxu0 %v103
    %111 = vmatpush1.msra.mxu0 %v102
    %112 = vmatprep.subr.mxu0 %v100
    %113 = vmatpush1.msra.mxu0 %v99
    %114 = vmatprep.subr.mxu0 %v97
    %115 = vmatpush1.msra.mxu0 %v96
    %116 = vmatprep.subr.mxu0 %v94
    %117 = vmatpush1.msra.mxu0 %v93
    %118 = vmatprep.subr.mxu0 %v91
    %119 = vmatpush1.msra.mxu0 %v90
    %120 = vmatprep.subr.mxu0 %v88
    %121 = vmatpush1.msra.mxu0 %v87
    %122 = vmatprep.subr.mxu0 %v85
    %123 = vmatpush1.msra.mxu0 %v84
    %124 = vmatprep.subr.mxu0 %v82
    %125 = vmatpush1.msra.mxu0 %v81
    %126 = vmatprep.subr.mxu0 %v79
    %127 = vmatpush1.msra.mxu0 %v78
    %128 = vmatprep.subr.mxu0 %v76
    %129 = vmatpush1.msra.mxu0 %v75
    %130 = vmatprep.subr.mxu0 %v73
    %131 = vmatpush1.msra.mxu0 %v72
    %132 = vmatprep.subr.mxu0 %v70
    %133 = vmatpush1.msra.mxu0 %v69
    %134 = vmatprep.subr.mxu0 %v67
    %135 = vmatpush1.msra.mxu0 %v66
    %136 = vmatprep.subr.mxu0 %v64
    %137 = vmatpush1.msra.mxu0 %v63
    %138 = vmatprep.subr.mxu0 %v61
    %139 = vmatpush1.msra.mxu0 %v60
    %140 = vmatprep.subr.mxu0 0.0
    %141 = vmatpush2.msra.mxu0 0.0
    %142 = vmatprep.subr.mxu0 0.0
    %143 = vmatpush2.msra.mxu0 0.0
    %144 = vmatprep.subr.mxu0 0.0
    %145 = vmatpush2.msra.mxu0 0.0
    %146 = vmatprep.subr.mxu0 0.0
    %147 = vmatpush2.msra.mxu0 0.0
    %148 = vmatprep.subr.mxu0 0.0
    %149 = vmatpush2.msra.mxu0 0.0
    %150 = vmatprep.subr.mxu0 0.0
    %151 = vmatpush2.msra.mxu0 0.0
    %152 = vmatprep.subr.mxu0 0.0
    %153 = vmatpush2.msra.mxu0 0.0
    %154 = vmatprep.subr.mxu0 0.0
    %155 = vmatpush2.msra.mxu0 0.0
    %156 = vmatprep.subr.mxu0 0.0
    %157 = vmatpush2.msra.mxu0 0.0
    %158 = vmatprep.subr.mxu0 0.0
    %159 = vmatpush2.msra.mxu0 0.0
    %160 = vmatprep.subr.mxu0 0.0
    %161 = vmatpush2.msra.mxu0 0.0
    %162 = vmatprep.subr.mxu0 0.0
    %163 = vmatpush2.msra.mxu0 0.0
    %164 = vmatprep.subr.mxu0 0.0
    %165 = vmatpush2.msra.mxu0 0.0
    %166 = vmatprep.subr.mxu0 0.0
    %167 = vmatpush2.msra.mxu0 0.0
    %168 = vmatprep.subr.mxu0 0.0
    %169 = vmatpush2.msra.mxu0 0.0
    %170 = vmatprep.subr.mxu0 0.0
    %171 = vmatpush2.msra.mxu0 0.0
    %172 = vmatprep.mubr.f32.mxu0 0.0
    %173 = vmatmul.mubr.f32.gmra.mxu0 %v58
    %v174 = vpop.f32.mrf.mxu0
    %v175 = vadd.f32 0.0, %v174
    %v176 = vpop.f32.mrf.mxu0
    %v177 = vadd.f32 0.0, %v176
    %178 = vmatprep.mubr.f32.mxu0 0.0
    %179 = vmatmul.mubr.f32.gmra.mxu0 %v59
    %v180 = vpop.f32.mrf.mxu0
    %v181 = vadd.f32 0.0, %v180
    %v182 = vpop.f32.mrf.mxu0
    %v183 = vadd.f32 0.0, %v182
    %184 = vdwg.mxu0
    %185 = vmatprep.subr.mxu0 0.0
    %186 = vmatpush1.msra.mxu0 %v107
    %187 = vmatprep.subr.mxu0 0.0
    %188 = vmatpush1.msra.mxu0 %v104
    %189 = vmatprep.subr.mxu0 0.0
    %190 = vmatpush1.msra.mxu0 %v101
    %191 = vmatprep.subr.mxu0 0.0
    %192 = vmatpush1.msra.mxu0 %v98
    %193 = vmatprep.subr.mxu0 0.0
    %194 = vmatpush1.msra.mxu0 %v95
    %195 = vmatprep.subr.mxu0 0.0
    %196 = vmatpush1.msra.mxu0 %v92
    %197 = vmatprep.subr.mxu0 0.0
    %198 = vmatpush1.msra.mxu0 %v89
    %199 = vmatprep.subr.mxu0 0.0
    %200 = vmatpush1.msra.mxu0 %v86
    %201 = vmatprep.subr.mxu0 0.0
    %202 = vmatpush1.msra.mxu0 %v83
    %203 = vmatprep.subr.mxu0 0.0
    %204 = vmatpush1.msra.mxu0 %v80
    %205 = vmatprep.subr.mxu0 0.0
    %206 = vmatpush1.msra.mxu0 %v77
    %207 = vmatprep.subr.mxu0 0.0
    %208 = vmatpush1.msra.mxu0 %v74
    %209 = vmatprep.subr.mxu0 0.0
    %210 = vmatpush1.msra.mxu0 %v71
    %211 = vmatprep.subr.mxu0 0.0
    %212 = vmatpush1.msra.mxu0 %v68
    %213 = vmatprep.subr.mxu0 0.0
    %214 = vmatpush1.msra.mxu0 %v65
    %215 = vmatprep.subr.mxu0 0.0
    %216 = vmatpush1.msra.mxu0 %v62
    %217 = vmatprep.subr.mxu0 0.0
    %218 = vmatpush2.msra.mxu0 0.0
    %219 = vmatprep.subr.mxu0 0.0
    %220 = vmatpush2.msra.mxu0 0.0
    %221 = vmatprep.subr.mxu0 0.0
    %222 = vmatpush2.msra.mxu0 0.0
    %223 = vmatprep.subr.mxu0 0.0
    %224 = vmatpush2.msra.mxu0 0.0
    %225 = vmatprep.subr.mxu0 0.0
    %226 = vmatpush2.msra.mxu0 0.0
    %227 = vmatprep.subr.mxu0 0.0
    %228 = vmatpush2.msra.mxu0 0.0
    %229 = vmatprep.subr.mxu0 0.0
    %230 = vmatpush2.msra.mxu0 0.0
    %231 = vmatprep.subr.mxu0 0.0
    %232 = vmatpush2.msra.mxu0 0.0
    %233 = vmatprep.subr.mxu0 0.0
    %234 = vmatpush2.msra.mxu0 0.0
    %235 = vmatprep.subr.mxu0 0.0
    %236 = vmatpush2.msra.mxu0 0.0
    %237 = vmatprep.subr.mxu0 0.0
    %238 = vmatpush2.msra.mxu0 0.0
    %239 = vmatprep.subr.mxu0 0.0
    %240 = vmatpush2.msra.mxu0 0.0
    %241 = vmatprep.subr.mxu0 0.0
    %242 = vmatpush2.msra.mxu0 0.0
    %243 = vmatprep.subr.mxu0 0.0
    %244 = vmatpush2.msra.mxu0 0.0
    %245 = vmatprep.subr.mxu0 0.0
    %246 = vmatpush2.msra.mxu0 0.0
    %247 = vmatprep.subr.mxu0 0.0
    %248 = vmatpush2.msra.mxu0 0.0
    %249 = vmatprep.mubr.f32.mxu0 0.0
    %250 = vmatmul.mubr.f32.gmra.mxu0 %v58
    %v251 = vpop.f32.mrf.mxu0
    %v252 = vadd.f32 0.0, %v251
    %v253 = vpop.f32.mrf.mxu0
    %254 = vmatprep.mubr.f32.mxu0 0.0
    %255 = vmatmul.mubr.f32.gmra.mxu0 %v59
    %v256 = vpop.f32.mrf.mxu0
    %v257 = vadd.f32 0.0, %v256
    %v258 = vpop.f32.mrf.mxu0
    %259 = vdwg.mxu0
    %v260 = vadd.f32 %v52, %v175
    %v261 = vadd.f32 %v53, %v177
    %v262 = vadd.f32 %v54, %v252
    %v263 = vadd.f32 %v55, %v181
    %v264 = vadd.f32 %v56, %v183
    %v265 = vadd.f32 %v57, %v257
    %266 = vst [vmem:[#allocation2] sm:$0xff] %v260
    %267 = vst [vmem:[#allocation2 + $0x8] sm:$0xff] %v261
    %268 = vst [vmem:[#allocation2 + $0x10] sm:$0xff] %v262
    %269 = vst [vmem:[#allocation2 + $0x18] sm:$0xff] %v263
    %270 = vst [vmem:[#allocation2 + $0x20] sm:$0xff] %v264
    %271 = vst [vmem:[#allocation2 + $0x28] sm:$0xff] %v265
    // Predicated region
    $region26: #{multi_head_attention.3} parent=1 // pred_check
      %p272 = pneg %p42
    $region27: #{multi_head_attention.3} parent=1 // pred_check_branch
      %274 = sbr.rel (%p272) target = $region29
    $region28: #{multi_head_attention.3} parent=1 // pred_region
      %v275 = vld [vmem:[#allocation2] sm:$0xff]
      %v276 = vld [vmem:[#allocation2 + $0x8] sm:$0xff]
      %v277 = vld [vmem:[#allocation2 + $0x10] sm:$0xff]
      %v278 = vld [vmem:[#allocation2 + $0x18] sm:$0xff]
      %v279 = vld [vmem:[#allocation2 + $0x20] sm:$0xff]
      %v280 = vld [vmem:[#allocation2 + $0x28] sm:$0xff]
      %v281 = vld [vmem:[%s2] sm:$0x7]
      %v283 = vlaneseq
      %v284 = vshrl.u32 %v283, 7
      %v285 = vsub.s32 0, %v284
      %v286 = vrot.slane %v281, %v285
      %v287 = vlaneseq
      %v288 = vshrl.u32 %v287, 7
      %v289 = vsub.s32 1, %v288
      %v290 = vrot.slane %v281, %v289
      %v291 = vlaneseq
      %v292 = vshrl.u32 %v291, 7
      %v293 = vsub.s32 2, %v292
      %v294 = vrot.slane %v281, %v293
      %v298 = vadd.f32 %v275, %v286
      %v299 = vadd.f32 %v276, %v290
      %v300 = vadd.f32 %v277, %v294
      %v301 = vadd.f32 %v278, %v286
      %v302 = vadd.f32 %v279, %v290
      %v303 = vadd.f32 %v280, %v294
      %304 = vst [vmem:[%s3] sm:$0xff] %v298
      %305 = vst [vmem:[%s3 + $0x8] sm:$0xff] %v299
      %306 = vst [vmem:[%s3 + $0x10] sm:$0xff] %v300
      %307 = vst [vmem:[%s3 + $0x18] sm:$0xff] %v301
      %308 = vst [vmem:[%s3 + $0x20] sm:$0xff] %v302
      %309 = vst [vmem:[%s3 + $0x28] sm:$0xff] %v303
    $region29: #{multi_head_attention.3} parent=1 // pred_fallthru
      _
    // Predicated region
    $region30: #{multi_head_attention.3} parent=1 // pred_check
      _
    $region31: #{multi_head_attention.3} parent=1 // pred_check_branch
      %311 = sbr.rel (0) target = $region33
    $region32: #{multi_head_attention.3} parent=1 // pred_region
      _
    $region33: #{multi_head_attention.3} parent=1 // pred_fallthru
      _
    // Predicated region
    $region34: #{multi_head_attention.3} parent=1 // pred_check
      _
    $region35: #{multi_head_attention.3} parent=1 // pred_check_branch
      %313 = sbr.rel (0) target = $region37
    $region36: #{multi_head_attention.3} parent=1 // pred_region
      _
    $region37: #{multi_head_attention.3} parent=1 // pred_fallthru
      _
    %314 = vsyncpa [#allocation4], 1
    %315 = vsyncpa [#allocation6], 1

// kernel: multi_head_attention.4
$region0: #{multi_head_attention.4}
  #allocation0 [shape = 'u32[]', space=smem, size = 0x4, offset = 0x4, fixed_abs, tag = 'smem constant byte address 0x4 - core index']
  #allocation1 [shape = 'u32[144,128]{1,0:T(1,128)}', space=vmem, size = 0x12000, scoped, tag = 'internal scratch']
  #allocation2 [shape = 'f32[4,8,1]{2,1,0:T(8,128)}', space=vmem, size = 0x4000, scoped, tag = 'scratch operand']
  #allocation3 [shape = 'f32[4,8,1]{2,1,0:T(8,128)}', space=vmem, size = 0x4000, scoped, tag = 'scratch operand']
  #allocation4 [shape = 'f32[8,128]{1,0:T(8,128)}', space=vmem, size = 0x1000, scoped, tag = 'scratch operand']
  %s0 = inlined_call_operand.vmem [shape: f32[2,8,384], index: 0, kind: input, shape index: {}, may-alias: {0,1,2}]
  %s1 = inlined_call_operand.vmem [shape: f32[2,8,384], index: 1, kind: input, shape index: {}, may-alias: {0,1,2}]
  %s2 = inlined_call_operand.vmem [shape: f32[2,8,384], index: 2, kind: input, shape index: {}, may-alias: {0,1,2}]
  %s3 = inlined_call_operand.vmem [shape: f32[2,8,128], index: 3, kind: output, shape index: {}]
  %s4 = sld [smem:[#allocation0]]
  $region53: #{multi_head_attention.4} parent=0
    _
  %s6 = ssub.s32 1, %s4
  %s7 = scalar_select 0, %s6, %s4
  loop: start=0, step=1, limit=4
  $region2: #{multi_head_attention.4} parent=0 // loop_pre_header
    _
  $region3: #{multi_head_attention.4} parent=0 // loop_header
    %s9 = sphi 0, %s13
    %p10 = scmp.ge.s32.totalorder %s9, 4
    %s16 = sphi 0, %s35
    %s17 = sphi 0, %s31
    %s18 = sphi 0, %s27
    %s19 = sphi 0, %s16
    %s20 = sphi 0, %s17
    %s21 = sphi 0, %s18
    %s22 = sphi 0, %s19
    %s23 = sphi 0, %s20
    %s24 = sphi 0, %s21
    %s40 = sphi 0, %s42
    %s43 = sphi 0, %s40
    %s44 = sphi 0, %s43
    %s60 = sphi 0, %s44
    %s68 = sphi 0, %s70
    %s71 = sphi 0, %s68
    %s72 = sphi 0, %s71
    %s88 = sphi 0, %s72
    %s96 = sphi 0, %s98
    %s99 = sphi 0, %s96
    %s100 = sphi 0, %s99
    %s116 = sphi 0, %s100
    %s124 = sphi 0, %s126
    %s127 = sphi 0, %s124
    %s128 = sphi 0, %s127
    %s144 = sphi 0, %s128
  $region4: #{multi_head_attention.4} parent=0 // loop_header_branch
    %12 = sbr.rel (%p10) target = $region8
  $region5: #{multi_head_attention.4} parent=0 // loop_body
    %s14 = ssub.s32 %s9, 1
    %s15 = ssub.s32 %s9, 2
    %s25 = sadd.s32 1, %s18
    %p26 = scmp.ge.s32.totalorder %s25, 1
    %s27 = scalar_select %p26, 0, %s25
    %s28 = sadd.s32 1, %s17
    %s29 = scalar_select %p26, %s28, %s17
    %p30 = scmp.ge.s32.totalorder %s29, 1
    %s31 = scalar_select %p30, 0, %s29
    %s32 = sadd.s32 1, %s16
    %s33 = scalar_select %p30, %s32, %s16
    %p34 = scmp.ge.s32.totalorder %s33, 2
    %s35 = scalar_select %p34, 0, %s33
    %s36 = ssub.s32 %s16, %s35
    %s37 = ssub.s32 %s17, %s31
    %s38 = sor.u32 %s36, %s37
    %p39 = scmp.eq.s32.totalorder %s38, 0
    %s41 = sadd.s32 %s40, 1
    %s42 = scalar_select %p39, %s40, %s41
    %p45 = pneg %p39
    %p46 = scmp.eq.s32.totalorder %s9, 1
    %p47 = por %p45, %p46
    %p48 = scmp.ne.s32.totalorder %s40, %s43
    %p49 = scmp.eq.s32.totalorder %s9, 0
    %p50 = por %p48, %p49
    %p51 = scmp.ne.s32.totalorder %s40, %s43
    %p52 = scmp.eq.s32.totalorder %s14, 1
    %p53 = por %p51, %p52
    %p54 = scmp.ne.s32.totalorder %s43, %s44
    %p55 = scmp.eq.s32.totalorder %s14, 0
    %p56 = por %p54, %p55
    %p57 = scmp.ne.s32.totalorder %s43, %s44
    %p58 = scmp.eq.s32.totalorder %s15, 1
    %p59 = por %p57, %p58
    %p61 = scmp.ne.s32.totalorder %s44, %s60
    %p62 = scmp.eq.s32.totalorder %s15, 0
    %p63 = por %p61, %p62
    %s64 = ssub.s32 %s16, %s35
    %s65 = ssub.s32 %s18, %s27
    %s66 = sor.u32 %s64, %s65
    %p67 = scmp.eq.s32.totalorder %s66, 0
    %s69 = sadd.s32 %s68, 1
    %s70 = scalar_select %p67, %s68, %s69
    %p73 = pneg %p67
    %p74 = scmp.eq.s32.totalorder %s9, 1
    %p75 = por %p73, %p74
    %p76 = scmp.ne.s32.totalorder %s68, %s71
    %p77 = scmp.eq.s32.totalorder %s9, 0
    %p78 = por %p76, %p77
    %p79 = scmp.ne.s32.totalorder %s68, %s71
    %p80 = scmp.eq.s32.totalorder %s14, 1
    %p81 = por %p79, %p80
    %p82 = scmp.ne.s32.totalorder %s71, %s72
    %p83 = scmp.eq.s32.totalorder %s14, 0
    %p84 = por %p82, %p83
    %p85 = scmp.ne.s32.totalorder %s71, %s72
    %p86 = scmp.eq.s32.totalorder %s15, 1
    %p87 = por %p85, %p86
    %p89 = scmp.ne.s32.totalorder %s72, %s88
    %p90 = scmp.eq.s32.totalorder %s15, 0
    %p91 = por %p89, %p90
    %s92 = ssub.s32 %s16, %s35
    %s93 = ssub.s32 %s18, %s27
    %s94 = sor.u32 %s92, %s93
    %p95 = scmp.eq.s32.totalorder %s94, 0
    %s97 = sadd.s32 %s96, 1
    %s98 = scalar_select %p95, %s96, %s97
    %p101 = pneg %p95
    %p102 = scmp.eq.s32.totalorder %s9, 1
    %p103 = por %p101, %p102
    %p104 = scmp.ne.s32.totalorder %s96, %s99
    %p105 = scmp.eq.s32.totalorder %s9, 0
    %p106 = por %p104, %p105
    %p107 = scmp.ne.s32.totalorder %s96, %s99
    %p108 = scmp.eq.s32.totalorder %s14, 1
    %p109 = por %p107, %p108
    %p110 = scmp.ne.s32.totalorder %s99, %s100
    %p111 = scmp.eq.s32.totalorder %s14, 0
    %p112 = por %p110, %p111
    %p113 = scmp.ne.s32.totalorder %s99, %s100
    %p114 = scmp.eq.s32.totalorder %s15, 1
    %p115 = por %p113, %p114
    %p117 = scmp.ne.s32.totalorder %s100, %s116
    %p118 = scmp.eq.s32.totalorder %s15, 0
    %p119 = por %p117, %p118
    %s120 = ssub.s32 %s16, %s35
    %s121 = ssub.s32 %s17, %s31
    %s122 = sor.u32 %s120, %s121
    %p123 = scmp.eq.s32.totalorder %s122, 0
    %s125 = sadd.s32 %s124, 1
    %s126 = scalar_select %p123, %s124, %s125
    %p129 = pneg %p123
    %p130 = scmp.eq.s32.totalorder %s9, 1
    %p131 = por %p129, %p130
    %p132 = scmp.ne.s32.totalorder %s124, %s127
    %p133 = scmp.eq.s32.totalorder %s9, 0
    %p134 = por %p132, %p133
    %p135 = scmp.ne.s32.totalorder %s124, %s127
    %p136 = scmp.eq.s32.totalorder %s14, 1
    %p137 = por %p135, %p136
    %p138 = scmp.ne.s32.totalorder %s127, %s128
    %p139 = scmp.eq.s32.totalorder %s14, 0
    %p140 = por %p138, %p139
    %p141 = scmp.ne.s32.totalorder %s127, %s128
    %p142 = scmp.eq.s32.totalorder %s15, 1
    %p143 = por %p141, %p142
    %p145 = scmp.ne.s32.totalorder %s128, %s144
    %p146 = scmp.eq.s32.totalorder %s15, 0
    %p147 = por %p145, %p146
    %p148 = scmp.le.s32.totalorder 1, %s9
    %p149 = scmp.lt.s32.totalorder %s9, 3
    %p150 = pnand %p148, %p149
    %p151 = pneg %p150
    // Predicated region
    $region9: #{multi_head_attention.4} parent=5 // pred_check
      _
    $region10: #{multi_head_attention.4} parent=5 // pred_check_branch
      %153 = sbr.rel (%p150) target = $region12
    $region11: #{multi_head_attention.4} parent=5 // pred_region
      %s154 = ssub.s32 %s9, 1
    $region12: #{multi_head_attention.4} parent=5 // pred_fallthru
      _
    %p155 = scmp.lt.s32.totalorder %s9, 2
    // Predicated region
    $region13: #{multi_head_attention.4} parent=5 // pred_check
      %p156 = pneg %p155
    $region14: #{multi_head_attention.4} parent=5 // pred_check_branch
      %158 = sbr.rel (%p156) target = $region16
    $region15: #{multi_head_attention.4} parent=5 // pred_region
      // Predicated region
      $region17: #{multi_head_attention.4} parent=15 // pred_check
        %p159 = pneg %p50
      $region18: #{multi_head_attention.4} parent=15 // pred_check_branch
        %161 = sbr.rel (%p159) target = $region20
      $region19: #{multi_head_attention.4} parent=15 // pred_region
        %p162 = scmp.lt.s32.totalorder %s16, 1
        %s163 = scalar_select %p162, %s16, 1
        %p164 = scmp.lt.s32.totalorder %s17, 0
        %s165 = scalar_select %p164, %s17, 0
        %s166 = smul.addr %s165, 3
        %s167 = smul.addr %s163, 3
        %s168 = sadd.s32 %s166, %s167
        %s169 = smul.addr %s168, 8
        %s170 = scalar_lea.vmem %s0, %s169
      $region20: #{multi_head_attention.4} parent=15 // pred_fallthru
        _
      // Predicated region
      $region21: #{multi_head_attention.4} parent=15 // pred_check
        %p171 = pneg %p78
      $region22: #{multi_head_attention.4} parent=15 // pred_check_branch
        %173 = sbr.rel (%p171) target = $region24
      $region23: #{multi_head_attention.4} parent=15 // pred_region
        %p174 = scmp.lt.s32.totalorder %s16, 1
        %s175 = scalar_select %p174, %s16, 1
        %p176 = scmp.lt.s32.totalorder %s18, 0
        %s177 = scalar_select %p176, %s18, 0
        %s178 = smul.addr %s177, 3
        %s179 = sadd.s32 1, %s178
        %s180 = smul.addr %s175, 3
        %s181 = sadd.s32 %s179, %s180
        %s182 = smul.addr %s181, 8
        %s183 = scalar_lea.vmem %s1, %s182
      $region24: #{multi_head_attention.4} parent=15 // pred_fallthru
        _
      // Predicated region
      $region25: #{multi_head_attention.4} parent=15 // pred_check
        %p184 = pneg %p106
      $region26: #{multi_head_attention.4} parent=15 // pred_check_branch
        %186 = sbr.rel (%p184) target = $region28
      $region27: #{multi_head_attention.4} parent=15 // pred_region
        %p187 = scmp.lt.s32.totalorder %s16, 1
        %s188 = scalar_select %p187, %s16, 1
        %p189 = scmp.lt.s32.totalorder %s18, 0
        %s190 = scalar_select %p189, %s18, 0
        %s191 = smul.addr %s190, 3
        %s192 = sadd.s32 2, %s191
        %s193 = smul.addr %s188, 3
        %s194 = sadd.s32 %s192, %s193
        %s195 = smul.addr %s194, 8
        %s196 = scalar_lea.vmem %s2, %s195
      $region28: #{multi_head_attention.4} parent=15 // pred_fallthru
        _
    $region16: #{multi_head_attention.4} parent=5 // pred_fallthru
      _
    %p197 = scmp.le.s32.totalorder 1, %s9
    %p198 = scmp.lt.s32.totalorder %s9, 3
    %p199 = pnand %p197, %p198
    %p200 = pneg %p199
    // Predicated region
    $region29: #{multi_head_attention.4} parent=5 // pred_check
      _
    $region30: #{multi_head_attention.4} parent=5 // pred_check_branch
      %202 = sbr.rel (%p199) target = $region32
    $region31: #{multi_head_attention.4} parent=5 // pred_region
      %s203 = ssub.s32 %s9, 1
      %p204 = scmp.lt.s32.totalorder %s19, 1
      %s205 = scalar_select %p204, %s19, 1
      %p206 = scmp.lt.s32.totalorder %s20, 0
      %s207 = scalar_select %p206, %s20, 0
      %s208 = smul.addr %s207, 3
      %s209 = smul.addr %s205, 3
      %s210 = sadd.s32 %s208, %s209
      %s211 = smul.addr %s210, 8
      %s212 = scalar_lea.vmem %s0, %s211
      %p213 = pneg %p56
      %p214 = pneg %p53
      %p215 = scmp.lt.s32.totalorder %s19, 1
      %s216 = scalar_select %p215, %s19, 1
      %p217 = scmp.lt.s32.totalorder %s21, 0
      %s218 = scalar_select %p217, %s21, 0
      %s219 = smul.addr %s218, 3
      %s220 = sadd.s32 1, %s219
      %s221 = smul.addr %s216, 3
      %s222 = sadd.s32 %s220, %s221
      %s223 = smul.addr %s222, 8
      %s224 = scalar_lea.vmem %s1, %s223
      %p225 = pneg %p84
      %p226 = pneg %p81
      %p227 = scmp.lt.s32.totalorder %s19, 1
      %s228 = scalar_select %p227, %s19, 1
      %p229 = scmp.lt.s32.totalorder %s21, 0
      %s230 = scalar_select %p229, %s21, 0
      %s231 = smul.addr %s230, 3
      %s232 = sadd.s32 2, %s231
      %s233 = smul.addr %s228, 3
      %s234 = sadd.s32 %s232, %s233
      %s235 = smul.addr %s234, 8
      %s236 = scalar_lea.vmem %s2, %s235
      %p237 = pneg %p112
      %p238 = pneg %p109
      %p239 = pneg %p140
      %p240 = pneg %p137
      %p241 = scmp.lt.s32.totalorder %s19, 1
      %s242 = scalar_select %p241, %s19, 1
      %p243 = scmp.lt.s32.totalorder %s20, 0
      %s244 = scalar_select %p243, %s20, 0
      %s245 = sadd.s32 %s244, %s242
      %s246 = smul.addr %s245, 8
      %s247 = scalar_lea.vmem %s3, %s246
      %p248 = scmp.lt.s32.totalorder %s19, 1
      %s249 = scalar_select %p248, %s19, 1
      %p250 = scmp.lt.s32.totalorder %s20, 0
      %s251 = scalar_select %p250, %s20, 0
      %s252 = smul.addr %s251, 3
      %s253 = smul.addr %s249, 3
      %s254 = sadd.s32 %s252, %s253
      %s255 = smul.addr %s254, 8
      %s256 = scalar_lea.vmem %s0, %s255
      %p257 = scmp.lt.s32.totalorder %s19, 1
      %s258 = scalar_select %p257, %s19, 1
      %p259 = scmp.lt.s32.totalorder %s21, 0
      %s260 = scalar_select %p259, %s21, 0
      %s261 = smul.addr %s260, 3
      %s262 = sadd.s32 1, %s261
      %s263 = smul.addr %s258, 3
      %s264 = sadd.s32 %s262, %s263
      %s265 = smul.addr %s264, 8
      %s266 = scalar_lea.vmem %s1, %s265
      %p267 = scmp.lt.s32.totalorder %s19, 1
      %s268 = scalar_select %p267, %s19, 1
      %p269 = scmp.lt.s32.totalorder %s21, 0
      %s270 = scalar_select %p269, %s21, 0
      %s271 = smul.addr %s270, 3
      %s272 = sadd.s32 2, %s271
      %s273 = smul.addr %s268, 3
      %s274 = sadd.s32 %s272, %s273
      %s275 = smul.addr %s274, 8
      %s276 = scalar_lea.vmem %s2, %s275
      %p277 = scmp.lt.s32.totalorder %s19, 1
      %s278 = scalar_select %p277, %s19, 1
      %p279 = scmp.lt.s32.totalorder %s20, 0
      %s280 = scalar_select %p279, %s20, 0
      %s281 = sadd.s32 %s280, %s278
      %s282 = smul.addr %s281, 8
      %s283 = scalar_lea.vmem %s3, %s282
      %p284 = scmp.eq.s32.totalorder %s21, 0
      // Predicated region
      $region33: #{multi_head_attention.4} parent=31 // pred_check
        %p285 = pneg %p284
      $region34: #{multi_head_attention.4} parent=31 // pred_check_branch
        %287 = sbr.rel (%p285) target = $region36
      $region35: #{multi_head_attention.4} parent=31 // pred_region
        %vm288 = vcmask 7168
        %289 = vst.msk [vmem:[#allocation2] sm:$0xff] %vm288, -inf
        %290 = vst.msk [vmem:[#allocation2 + $0x8] sm:$0xff] %vm288, -inf
        %291 = vst.msk [vmem:[#allocation2 + $0x10] sm:$0xff] %vm288, -inf
        %292 = vst.msk [vmem:[#allocation2 + $0x18] sm:$0xff] %vm288, -inf
        %293 = vst.msk [vmem:[#allocation3] sm:$0xff] %vm288, 0.0
        %294 = vst.msk [vmem:[#allocation3 + $0x8] sm:$0xff] %vm288, 0.0
        %295 = vst.msk [vmem:[#allocation3 + $0x10] sm:$0xff] %vm288, 0.0
        %296 = vst.msk [vmem:[#allocation3 + $0x18] sm:$0xff] %vm288, 0.0
        %297 = vst [vmem:[#allocation4] sm:$0xff] 0.0
      $region36: #{multi_head_attention.4} parent=31 // pred_fallthru
        _
      %v298 = vld [vmem:[%s256] sm:$0xff]
      %v299 = vmul.f32 %v298, 0.17677669
      %v300 = vld [vmem:[%s266] sm:$0xff]
      %v301 = vld [vmem:[%s276] sm:$0xff]
      %vm302 = vcmask 261120
      %v304 = vsel %vm302, %v299, 0
      %v307 = vsel %vm302, %v300, 0
      %309 = vmatprep.subr.mxu0 0.0
      %310 = vmatpush1.xpose.msra.mxu0 0.0
      %311 = vmatprep.subr.mxu0 0.0
      %312 = vmatpush1.xpose.msra.mxu0 0.0
      %313 = vmatprep.subr.mxu0 0.0
      %314 = vmatpush1.xpose.msra.mxu0 0.0
      %315 = vmatprep.subr.mxu0 0.0
      %316 = vmatpush1.xpose.msra.mxu0 0.0
      %317 = vmatprep.subr.mxu0 0.0
      %318 = vmatpush1.xpose.msra.mxu0 0.0
      %319 = vmatprep.subr.mxu0 0.0
      %320 = vmatpush1.xpose.msra.mxu0 0.0
      %321 = vmatprep.subr.mxu0 0.0
      %322 = vmatpush1.xpose.msra.mxu0 0.0
      %323 = vmatprep.subr.mxu0 0.0
      %324 = vmatpush1.xpose.msra.mxu0 0.0
      %325 = vmatprep.subr.mxu0 0.0
      %326 = vmatpush1.xpose.msra.mxu0 0.0
      %327 = vmatprep.subr.mxu0 0.0
      %328 = vmatpush1.xpose.msra.mxu0 0.0
      %329 = vmatprep.subr.mxu0 0.0
      %330 = vmatpush1.xpose.msra.mxu0 0.0
      %331 = vmatprep.subr.mxu0 0.0
      %332 = vmatpush1.xpose.msra.mxu0 0.0
      %333 = vmatprep.subr.mxu0 0.0
      %334 = vmatpush1.xpose.msra.mxu0 0.0
      %335 = vmatprep.subr.mxu0 0.0
      %336 = vmatpush1.xpose.msra.mxu0 0.0
      %337 = vmatprep.subr.mxu0 0.0
      %338 = vmatpush1.xpose.msra.mxu0 0.0
      %339 = vmatprep.subr.mxu0 0.0
      %340 = vmatpush1.xpose.msra.mxu0 %v307
      %341 = vmatprep.subr.mxu0 0.0
      %342 = vmatpush2.xpose.msra.mxu0 0.0
      %343 = vmatprep.subr.mxu0 0.0
      %344 = vmatpush2.xpose.msra.mxu0 0.0
      %345 = vmatprep.subr.mxu0 0.0
      %346 = vmatpush2.xpose.msra.mxu0 0.0
      %347 = vmatprep.subr.mxu0 0.0
      %348 = vmatpush2.xpose.msra.mxu0 0.0
      %349 = vmatprep.subr.mxu0 0.0
      %350 = vmatpush2.xpose.msra.mxu0 0.0
      %351 = vmatprep.subr.mxu0 0.0
      %352 = vmatpush2.xpose.msra.mxu0 0.0
      %353 = vmatprep.subr.mxu0 0.0
      %354 = vmatpush2.xpose.msra.mxu0 0.0
      %355 = vmatprep.subr.mxu0 0.0
      %356 = vmatpush2.xpose.msra.mxu0 0.0
      %357 = vmatprep.subr.mxu0 0.0
      %358 = vmatpush2.xpose.msra.mxu0 0.0
      %359 = vmatprep.subr.mxu0 0.0
      %360 = vmatpush2.xpose.msra.mxu0 0.0
      %361 = vmatprep.subr.mxu0 0.0
      %362 = vmatpush2.xpose.msra.mxu0 0.0
      %363 = vmatprep.subr.mxu0 0.0
      %364 = vmatpush2.xpose.msra.mxu0 0.0
      %365 = vmatprep.subr.mxu0 0.0
      %366 = vmatpush2.xpose.msra.mxu0 0.0
      %367 = vmatprep.subr.mxu0 0.0
      %368 = vmatpush2.xpose.msra.mxu0 0.0
      %369 = vmatprep.subr.mxu0 0.0
      %370 = vmatpush2.xpose.msra.mxu0 0.0
      %371 = vmatprep.subr.mxu0 0.0
      %372 = vmatpush2.xpose.msra.mxu0 0.0
      %373 = vmatprep.mubr.f32.mxu0 0.0
      %374 = vmatmul.mubr.f32.gmra.mxu0 %v304
      %v375 = vpop.f32.mrf.mxu0
      %v376 = vadd.f32 0.0, %v375
      %v377 = vpop.f32.mrf.mxu0
      %378 = vdwg.mxu0
      %v379 = vld [vmem:[#allocation2] sm:$0xff]
      %vm380 = vcmask 64512
      %v381 = vsel %vm380, %v376, -inf
      %382 = vmax.xlane.f32.xlu0 %v381
      %v383 = vpop.xlane.xlu0 %382
      %v384 = vmax.f32 %v379, %v383
      %v385 = vsub.f32 %v379, %v384
      %v386 = vmul.f32 %v385, 1.442695
      %v387 = vpow.pop %v386
      %389 = vset.pattern.permute.xlu0 0
      %390 = vperm.xlu0 %389, %v384
      %v391 = vpop.permute.xlu0 %390
      %v393 = vsub.f32 %v376, %v391
      %v394 = vmul.f32 %v393, 1.442695
      %v395 = vpow.pop %v394
      %v396 = vld [vmem:[#allocation3] sm:$0xff]
      %v397 = vmul.f32 %v387, %v396
      %v398 = vsel %vm380, %v395, 0.0
      %399 = vadd.xlane.f32.xlu0 %v398
      %v400 = vpop.xlane.xlu0 %399
      %v401 = vadd.f32 %v397, %v400
      %vm402 = vcmask 7168
      %403 = vst.msk [vmem:[#allocation3] sm:$0xff] %vm402, %v401
      %v405 = vsel %vm380, %v395, 0
      %407 = vmatprep.subr.mxu0 0.0
      %408 = vmatpush1.msra.mxu0 0.0
      %409 = vmatprep.subr.mxu0 0.0
      %410 = vmatpush1.msra.mxu0 0.0
      %411 = vmatprep.subr.mxu0 0.0
      %412 = vmatpush1.msra.mxu0 0.0
      %413 = vmatprep.subr.mxu0 0.0
      %414 = vmatpush1.msra.mxu0 0.0
      %415 = vmatprep.subr.mxu0 0.0
      %416 = vmatpush1.msra.mxu0 0.0
      %417 = vmatprep.subr.mxu0 0.0
      %418 = vmatpush1.msra.mxu0 0.0
      %419 = vmatprep.subr.mxu0 0.0
      %420 = vmatpush1.msra.mxu0 0.0
      %421 = vmatprep.subr.mxu0 0.0
      %422 = vmatpush1.msra.mxu0 0.0
      %423 = vmatprep.subr.mxu0 0.0
      %424 = vmatpush1.msra.mxu0 0.0
      %425 = vmatprep.subr.mxu0 0.0
      %426 = vmatpush1.msra.mxu0 0.0
      %427 = vmatprep.subr.mxu0 0.0
      %428 = vmatpush1.msra.mxu0 0.0
      %429 = vmatprep.subr.mxu0 0.0
      %430 = vmatpush1.msra.mxu0 0.0
      %431 = vmatprep.subr.mxu0 0.0
      %432 = vmatpush1.msra.mxu0 0.0
      %433 = vmatprep.subr.mxu0 0.0
      %434 = vmatpush1.msra.mxu0 0.0
      %435 = vmatprep.subr.mxu0 0.0
      %436 = vmatpush1.msra.mxu0 0.0
      %437 = vmatprep.subr.mxu0 0.0
      %438 = vmatpush1.msra.mxu0 %v301
      %439 = vmatprep.subr.mxu0 0.0
      %440 = vmatpush2.msra.mxu0 0.0
      %441 = vmatprep.subr.mxu0 0.0
      %442 = vmatpush2.msra.mxu0 0.0
      %443 = vmatprep.subr.mxu0 0.0
      %444 = vmatpush2.msra.mxu0 0.0
      %445 = vmatprep.subr.mxu0 0.0
      %446 = vmatpush2.msra.mxu0 0.0
      %447 = vmatprep.subr.mxu0 0.0
      %448 = vmatpush2.msra.mxu0 0.0
      %449 = vmatprep.subr.mxu0 0.0
      %450 = vmatpush2.msra.mxu0 0.0
      %451 = vmatprep.subr.mxu0 0.0
      %452 = vmatpush2.msra.mxu0 0.0
      %453 = vmatprep.subr.mxu0 0.0
      %454 = vmatpush2.msra.mxu0 0.0
      %455 = vmatprep.subr.mxu0 0.0
      %456 = vmatpush2.msra.mxu0 0.0
      %457 = vmatprep.subr.mxu0 0.0
      %458 = vmatpush2.msra.mxu0 0.0
      %459 = vmatprep.subr.mxu0 0.0
      %460 = vmatpush2.msra.mxu0 0.0
      %461 = vmatprep.subr.mxu0 0.0
      %462 = vmatpush2.msra.mxu0 0.0
      %463 = vmatprep.subr.mxu0 0.0
      %464 = vmatpush2.msra.mxu0 0.0
      %465 = vmatprep.subr.mxu0 0.0
      %466 = vmatpush2.msra.mxu0 0.0
      %467 = vmatprep.subr.mxu0 0.0
      %468 = vmatpush2.msra.mxu0 0.0
      %469 = vmatprep.subr.mxu0 0.0
      %470 = vmatpush2.msra.mxu0 0.0
      %471 = vmatprep.mubr.f32.mxu0 0.0
      %472 = vmatmul.mubr.f32.gmra.mxu0 %v405
      %v473 = vpop.f32.mrf.mxu0
      %v474 = vadd.f32 0.0, %v473
      %v475 = vpop.f32.mrf.mxu0
      %476 = vdwg.mxu0
      %v477 = vld [vmem:[#allocation4] sm:$0xff]
      %479 = vset.pattern.permute.xlu0 0
      %480 = vperm.xlu0 %479, %v387
      %v481 = vpop.permute.xlu0 %480
      %v483 = vmul.f32 %v481, %v477
      %v484 = vadd.f32 %v483, %v474
      %485 = vst.msk [vmem:[#allocation4] sm:$0xff] %vm302, %v484
      %486 = vst.msk [vmem:[#allocation2] sm:$0xff] %vm402, %v384
      %v487 = vld [vmem:[%s256] sm:$0xff]
      %v488 = vmul.f32 %v487, 0.17677669
      %v489 = vld [vmem:[%s266] sm:$0xff]
      %v490 = vld [vmem:[%s276] sm:$0xff]
      %492 = vrot.lane.b32.xlu0 %v488, 96
      %v493 = vpop.permute.xlu0 %492
      %495 = vrot.lane.b32.xlu0 %v489, 96
      %v496 = vpop.permute.xlu0 %495
      %v497 = vsel %vm302, %v493, 0
      %v499 = vsel %vm302, %v496, 0
      %501 = vmatprep.subr.mxu0 0.0
      %502 = vmatpush1.xpose.msra.mxu0 0.0
      %503 = vmatprep.subr.mxu0 0.0
      %504 = vmatpush1.xpose.msra.mxu0 0.0
      %505 = vmatprep.subr.mxu0 0.0
      %506 = vmatpush1.xpose.msra.mxu0 0.0
      %507 = vmatprep.subr.mxu0 0.0
      %508 = vmatpush1.xpose.msra.mxu0 0.0
      %509 = vmatprep.subr.mxu0 0.0
      %510 = vmatpush1.xpose.msra.mxu0 0.0
      %511 = vmatprep.subr.mxu0 0.0
      %512 = vmatpush1.xpose.msra.mxu0 0.0
      %513 = vmatprep.subr.mxu0 0.0
      %514 = vmatpush1.xpose.msra.mxu0 0.0
      %515 = vmatprep.subr.mxu0 0.0
      %516 = vmatpush1.xpose.msra.mxu0 0.0
      %517 = vmatprep.subr.mxu0 0.0
      %518 = vmatpush1.xpose.msra.mxu0 0.0
      %519 = vmatprep.subr.mxu0 0.0
      %520 = vmatpush1.xpose.msra.mxu0 0.0
      %521 = vmatprep.subr.mxu0 0.0
      %522 = vmatpush1.xpose.msra.mxu0 0.0
      %523 = vmatprep.subr.mxu0 0.0
      %524 = vmatpush1.xpose.msra.mxu0 0.0
      %525 = vmatprep.subr.mxu0 0.0
      %526 = vmatpush1.xpose.msra.mxu0 0.0
      %527 = vmatprep.subr.mxu0 0.0
      %528 = vmatpush1.xpose.msra.mxu0 0.0
      %529 = vmatprep.subr.mxu0 0.0
      %530 = vmatpush1.xpose.msra.mxu0 0.0
      %531 = vmatprep.subr.mxu0 0.0
      %532 = vmatpush1.xpose.msra.mxu0 %v499
      %533 = vmatprep.subr.mxu0 0.0
      %534 = vmatpush2.xpose.msra.mxu0 0.0
      %535 = vmatprep.subr.mxu0 0.0
      %536 = vmatpush2.xpose.msra.mxu0 0.0
      %537 = vmatprep.subr.mxu0 0.0
      %538 = vmatpush2.xpose.msra.mxu0 0.0
      %539 = vmatprep.subr.mxu0 0.0
      %540 = vmatpush2.xpose.msra.mxu0 0.0
      %541 = vmatprep.subr.mxu0 0.0
      %542 = vmatpush2.xpose.msra.mxu0 0.0
      %543 = vmatprep.subr.mxu0 0.0
      %544 = vmatpush2.xpose.msra.mxu0 0.0
      %545 = vmatprep.subr.mxu0 0.0
      %546 = vmatpush2.xpose.msra.mxu0 0.0
      %547 = vmatprep.subr.mxu0 0.0
      %548 = vmatpush2.xpose.msra.mxu0 0.0
      %549 = vmatprep.subr.mxu0 0.0
      %550 = vmatpush2.xpose.msra.mxu0 0.0
      %551 = vmatprep.subr.mxu0 0.0
      %552 = vmatpush2.xpose.msra.mxu0 0.0
      %553 = vmatprep.subr.mxu0 0.0
      %554 = vmatpush2.xpose.msra.mxu0 0.0
      %555 = vmatprep.subr.mxu0 0.0
      %556 = vmatpush2.xpose.msra.mxu0 0.0
      %557 = vmatprep.subr.mxu0 0.0
      %558 = vmatpush2.xpose.msra.mxu0 0.0
      %559 = vmatprep.subr.mxu0 0.0
      %560 = vmatpush2.xpose.msra.mxu0 0.0
      %561 = vmatprep.subr.mxu0 0.0
      %562 = vmatpush2.xpose.msra.mxu0 0.0
      %563 = vmatprep.subr.mxu0 0.0
      %564 = vmatpush2.xpose.msra.mxu0 0.0
      %565 = vmatprep.mubr.f32.mxu0 0.0
      %566 = vmatmul.mubr.f32.gmra.mxu0 %v497
      %v567 = vpop.f32.mrf.mxu0
      %v568 = vadd.f32 0.0, %v567
      %v569 = vpop.f32.mrf.mxu0
      %570 = vdwg.mxu0
      %s571 = scalar_lea.vmem [#allocation2], 8
      %v572 = vld [vmem:[%s571] sm:$0xff]
      %v573 = vsel %vm380, %v568, -inf
      %574 = vmax.xlane.f32.xlu0 %v573
      %v575 = vpop.xlane.xlu0 %574
      %v576 = vmax.f32 %v572, %v575
      %v577 = vsub.f32 %v572, %v576
      %v578 = vmul.f32 %v577, 1.442695
      %v579 = vpow.pop %v578
      %581 = vset.pattern.permute.xlu0 0
      %582 = vperm.xlu0 %581, %v576
      %v583 = vpop.permute.xlu0 %582
      %v585 = vsub.f32 %v568, %v583
      %v586 = vmul.f32 %v585, 1.442695
      %v587 = vpow.pop %v586
      %s588 = scalar_lea.vmem [#allocation3], 8
      %v589 = vld [vmem:[%s588] sm:$0xff]
      %v590 = vmul.f32 %v579, %v589
      %v591 = vsel %vm380, %v587, 0.0
      %592 = vadd.xlane.f32.xlu0 %v591
      %v593 = vpop.xlane.xlu0 %592
      %v594 = vadd.f32 %v590, %v593
      %595 = vst.msk [vmem:[%s588] sm:$0xff] %vm402, %v594
      %597 = vrot.lane.b32.xlu0 %v490, 96
      %v598 = vpop.permute.xlu0 %597
      %v601 = vsel %vm380, %v587, 0
      %603 = vmatprep.subr.mxu0 0.0
      %604 = vmatpush1.msra.mxu0 0.0
      %605 = vmatprep.subr.mxu0 0.0
      %606 = vmatpush1.msra.mxu0 0.0
      %607 = vmatprep.subr.mxu0 0.0
      %608 = vmatpush1.msra.mxu0 0.0
      %609 = vmatprep.subr.mxu0 0.0
      %610 = vmatpush1.msra.mxu0 0.0
      %611 = vmatprep.subr.mxu0 0.0
      %612 = vmatpush1.msra.mxu0 0.0
      %613 = vmatprep.subr.mxu0 0.0
      %614 = vmatpush1.msra.mxu0 0.0
      %615 = vmatprep.subr.mxu0 0.0
      %616 = vmatpush1.msra.mxu0 0.0
      %617 = vmatprep.subr.mxu0 0.0
      %618 = vmatpush1.msra.mxu0 0.0
      %619 = vmatprep.subr.mxu0 0.0
      %620 = vmatpush1.msra.mxu0 0.0
      %621 = vmatprep.subr.mxu0 0.0
      %622 = vmatpush1.msra.mxu0 0.0
      %623 = vmatprep.subr.mxu0 0.0
      %624 = vmatpush1.msra.mxu0 0.0
      %625 = vmatprep.subr.mxu0 0.0
      %626 = vmatpush1.msra.mxu0 0.0
      %627 = vmatprep.subr.mxu0 0.0
      %628 = vmatpush1.msra.mxu0 0.0
      %629 = vmatprep.subr.mxu0 0.0
      %630 = vmatpush1.msra.mxu0 0.0
      %631 = vmatprep.subr.mxu0 0.0
      %632 = vmatpush1.msra.mxu0 0.0
      %633 = vmatprep.subr.mxu0 0.0
      %634 = vmatpush1.msra.mxu0 %v598
      %635 = vmatprep.subr.mxu0 0.0
      %636 = vmatpush2.msra.mxu0 0.0
      %637 = vmatprep.subr.mxu0 0.0
      %638 = vmatpush2.msra.mxu0 0.0
      %639 = vmatprep.subr.mxu0 0.0
      %640 = vmatpush2.msra.mxu0 0.0
      %641 = vmatprep.subr.mxu0 0.0
      %642 = vmatpush2.msra.mxu0 0.0
      %643 = vmatprep.subr.mxu0 0.0
      %644 = vmatpush2.msra.mxu0 0.0
      %645 = vmatprep.subr.mxu0 0.0
      %646 = vmatpush2.msra.mxu0 0.0
      %647 = vmatprep.subr.mxu0 0.0
      %648 = vmatpush2.msra.mxu0 0.0
      %649 = vmatprep.subr.mxu0 0.0
      %650 = vmatpush2.msra.mxu0 0.0
      %651 = vmatprep.subr.mxu0 0.0
      %652 = vmatpush2.msra.mxu0 0.0
      %653 = vmatprep.subr.mxu0 0.0
      %654 = vmatpush2.msra.mxu0 0.0
      %655 = vmatprep.subr.mxu0 0.0
      %656 = vmatpush2.msra.mxu0 0.0
      %657 = vmatprep.subr.mxu0 0.0
      %658 = vmatpush2.msra.mxu0 0.0
      %659 = vmatprep.subr.mxu0 0.0
      %660 = vmatpush2.msra.mxu0 0.0
      %661 = vmatprep.subr.mxu0 0.0
      %662 = vmatpush2.msra.mxu0 0.0
      %663 = vmatprep.subr.mxu0 0.0
      %664 = vmatpush2.msra.mxu0 0.0
      %665 = vmatprep.subr.mxu0 0.0
      %666 = vmatpush2.msra.mxu0 0.0
      %667 = vmatprep.mubr.f32.mxu0 0.0
      %668 = vmatmul.mubr.f32.gmra.mxu0 %v601
      %v669 = vpop.f32.mrf.mxu0
      %v670 = vadd.f32 0.0, %v669
      %v671 = vpop.f32.mrf.mxu0
      %672 = vdwg.mxu0
      %v673 = vld [vmem:[#allocation4] sm:$0xff]
      %675 = vset.pattern.permute.xlu0 0
      %676 = vperm.xlu0 %675, %v579
      %v677 = vpop.permute.xlu0 %676
      %v679 = vmul.f32 %v677, %v673
      %681 = vrot.lane.b32.xlu0 %v670, 32
      %v682 = vpop.permute.xlu0 %681
      %v684 = vadd.f32 %v679, %v682
      %vm685 = vcmask 523520
      %686 = vst.msk [vmem:[#allocation4] sm:$0xff] %vm685, %v684
      %687 = vst.msk [vmem:[%s571] sm:$0xff] %vm402, %v576
      %v688 = vld [vmem:[%s256] sm:$0xff]
      %v689 = vmul.f32 %v688, 0.17677669
      %v690 = vld [vmem:[%s266] sm:$0xff]
      %v691 = vld [vmem:[%s276] sm:$0xff]
      %693 = vrot.lane.b32.xlu0 %v689, 64
      %v694 = vpop.permute.xlu0 %693
      %696 = vrot.lane.b32.xlu0 %v690, 64
      %v697 = vpop.permute.xlu0 %696
      %v698 = vsel %vm302, %v694, 0
      %v700 = vsel %vm302, %v697, 0
      %702 = vmatprep.subr.mxu0 0.0
      %703 = vmatpush1.xpose.msra.mxu0 0.0
      %704 = vmatprep.subr.mxu0 0.0
      %705 = vmatpush1.xpose.msra.mxu0 0.0
      %706 = vmatprep.subr.mxu0 0.0
      %707 = vmatpush1.xpose.msra.mxu0 0.0
      %708 = vmatprep.subr.mxu0 0.0
      %709 = vmatpush1.xpose.msra.mxu0 0.0
      %710 = vmatprep.subr.mxu0 0.0
      %711 = vmatpush1.xpose.msra.mxu0 0.0
      %712 = vmatprep.subr.mxu0 0.0
      %713 = vmatpush1.xpose.msra.mxu0 0.0
      %714 = vmatprep.subr.mxu0 0.0
      %715 = vmatpush1.xpose.msra.mxu0 0.0
      %716 = vmatprep.subr.mxu0 0.0
      %717 = vmatpush1.xpose.msra.mxu0 0.0
      %718 = vmatprep.subr.mxu0 0.0
      %719 = vmatpush1.xpose.msra.mxu0 0.0
      %720 = vmatprep.subr.mxu0 0.0
      %721 = vmatpush1.xpose.msra.mxu0 0.0
      %722 = vmatprep.subr.mxu0 0.0
      %723 = vmatpush1.xpose.msra.mxu0 0.0
      %724 = vmatprep.subr.mxu0 0.0
      %725 = vmatpush1.xpose.msra.mxu0 0.0
      %726 = vmatprep.subr.mxu0 0.0
      %727 = vmatpush1.xpose.msra.mxu0 0.0
      %728 = vmatprep.subr.mxu0 0.0
      %729 = vmatpush1.xpose.msra.mxu0 0.0
      %730 = vmatprep.subr.mxu0 0.0
      %731 = vmatpush1.xpose.msra.mxu0 0.0
      %732 = vmatprep.subr.mxu0 0.0
      %733 = vmatpush1.xpose.msra.mxu0 %v700
      %734 = vmatprep.subr.mxu0 0.0
      %735 = vmatpush2.xpose.msra.mxu0 0.0
      %736 = vmatprep.subr.mxu0 0.0
      %737 = vmatpush2.xpose.msra.mxu0 0.0
      %738 = vmatprep.subr.mxu0 0.0
      %739 = vmatpush2.xpose.msra.mxu0 0.0
      %740 = vmatprep.subr.mxu0 0.0
      %741 = vmatpush2.xpose.msra.mxu0 0.0
      %742 = vmatprep.subr.mxu0 0.0
      %743 = vmatpush2.xpose.msra.mxu0 0.0
      %744 = vmatprep.subr.mxu0 0.0
      %745 = vmatpush2.xpose.msra.mxu0 0.0
      %746 = vmatprep.subr.mxu0 0.0
      %747 = vmatpush2.xpose.msra.mxu0 0.0
      %748 = vmatprep.subr.mxu0 0.0
      %749 = vmatpush2.xpose.msra.mxu0 0.0
      %750 = vmatprep.subr.mxu0 0.0
      %751 = vmatpush2.xpose.msra.mxu0 0.0
      %752 = vmatprep.subr.mxu0 0.0
      %753 = vmatpush2.xpose.msra.mxu0 0.0
      %754 = vmatprep.subr.mxu0 0.0
      %755 = vmatpush2.xpose.msra.mxu0 0.0
      %756 = vmatprep.subr.mxu0 0.0
      %757 = vmatpush2.xpose.msra.mxu0 0.0
      %758 = vmatprep.subr.mxu0 0.0
      %759 = vmatpush2.xpose.msra.mxu0 0.0
      %760 = vmatprep.subr.mxu0 0.0
      %761 = vmatpush2.xpose.msra.mxu0 0.0
      %762 = vmatprep.subr.mxu0 0.0
      %763 = vmatpush2.xpose.msra.mxu0 0.0
      %764 = vmatprep.subr.mxu0 0.0
      %765 = vmatpush2.xpose.msra.mxu0 0.0
      %766 = vmatprep.mubr.f32.mxu0 0.0
      %767 = vmatmul.mubr.f32.gmra.mxu0 %v698
      %v768 = vpop.f32.mrf.mxu0
      %v769 = vadd.f32 0.0, %v768
      %v770 = vpop.f32.mrf.mxu0
      %771 = vdwg.mxu0
      %s772 = scalar_lea.vmem [#allocation2], 16
      %v773 = vld [vmem:[%s772] sm:$0xff]
      %v774 = vsel %vm380, %v769, -inf
      %775 = vmax.xlane.f32.xlu0 %v774
      %v776 = vpop.xlane.xlu0 %775
      %v777 = vmax.f32 %v773, %v776
      %v778 = vsub.f32 %v773, %v777
      %v779 = vmul.f32 %v778, 1.442695
      %v780 = vpow.pop %v779
      %782 = vset.pattern.permute.xlu0 0
      %783 = vperm.xlu0 %782, %v777
      %v784 = vpop.permute.xlu0 %783
      %v786 = vsub.f32 %v769, %v784
      %v787 = vmul.f32 %v786, 1.442695
      %v788 = vpow.pop %v787
      %s789 = scalar_lea.vmem [#allocation3], 16
      %v790 = vld [vmem:[%s789] sm:$0xff]
      %v791 = vmul.f32 %v780, %v790
      %v792 = vsel %vm380, %v788, 0.0
      %793 = vadd.xlane.f32.xlu0 %v792
      %v794 = vpop.xlane.xlu0 %793
      %v795 = vadd.f32 %v791, %v794
      %796 = vst.msk [vmem:[%s789] sm:$0xff] %vm402, %v795
      %798 = vrot.lane.b32.xlu0 %v691, 64
      %v799 = vpop.permute.xlu0 %798
      %v802 = vsel %vm380, %v788, 0
      %804 = vmatprep.subr.mxu0 0.0
      %805 = vmatpush1.msra.mxu0 0.0
      %806 = vmatprep.subr.mxu0 0.0
      %807 = vmatpush1.msra.mxu0 0.0
      %808 = vmatprep.subr.mxu0 0.0
      %809 = vmatpush1.msra.mxu0 0.0
      %810 = vmatprep.subr.mxu0 0.0
      %811 = vmatpush1.msra.mxu0 0.0
      %812 = vmatprep.subr.mxu0 0.0
      %813 = vmatpush1.msra.mxu0 0.0
      %814 = vmatprep.subr.mxu0 0.0
      %815 = vmatpush1.msra.mxu0 0.0
      %816 = vmatprep.subr.mxu0 0.0
      %817 = vmatpush1.msra.mxu0 0.0
      %818 = vmatprep.subr.mxu0 0.0
      %819 = vmatpush1.msra.mxu0 0.0
      %820 = vmatprep.subr.mxu0 0.0
      %821 = vmatpush1.msra.mxu0 0.0
      %822 = vmatprep.subr.mxu0 0.0
      %823 = vmatpush1.msra.mxu0 0.0
      %824 = vmatprep.subr.mxu0 0.0
      %825 = vmatpush1.msra.mxu0 0.0
      %826 = vmatprep.subr.mxu0 0.0
      %827 = vmatpush1.msra.mxu0 0.0
      %828 = vmatprep.subr.mxu0 0.0
      %829 = vmatpush1.msra.mxu0 0.0
      %830 = vmatprep.subr.mxu0 0.0
      %831 = vmatpush1.msra.mxu0 0.0
      %832 = vmatprep.subr.mxu0 0.0
      %833 = vmatpush1.msra.mxu0 0.0
      %834 = vmatprep.subr.mxu0 0.0
      %835 = vmatpush1.msra.mxu0 %v799
      %836 = vmatprep.subr.mxu0 0.0
      %837 = vmatpush2.msra.mxu0 0.0
      %838 = vmatprep.subr.mxu0 0.0
      %839 = vmatpush2.msra.mxu0 0.0
      %840 = vmatprep.subr.mxu0 0.0
      %841 = vmatpush2.msra.mxu0 0.0
      %842 = vmatprep.subr.mxu0 0.0
      %843 = vmatpush2.msra.mxu0 0.0
      %844 = vmatprep.subr.mxu0 0.0
      %845 = vmatpush2.msra.mxu0 0.0
      %846 = vmatprep.subr.mxu0 0.0
      %847 = vmatpush2.msra.mxu0 0.0
      %848 = vmatprep.subr.mxu0 0.0
      %849 = vmatpush2.msra.mxu0 0.0
      %850 = vmatprep.subr.mxu0 0.0
      %851 = vmatpush2.msra.mxu0 0.0
      %852 = vmatprep.subr.mxu0 0.0
      %853 = vmatpush2.msra.mxu0 0.0
      %854 = vmatprep.subr.mxu0 0.0
      %855 = vmatpush2.msra.mxu0 0.0
      %856 = vmatprep.subr.mxu0 0.0
      %857 = vmatpush2.msra.mxu0 0.0
      %858 = vmatprep.subr.mxu0 0.0
      %859 = vmatpush2.msra.mxu0 0.0
      %860 = vmatprep.subr.mxu0 0.0
      %861 = vmatpush2.msra.mxu0 0.0
      %862 = vmatprep.subr.mxu0 0.0
      %863 = vmatpush2.msra.mxu0 0.0
      %864 = vmatprep.subr.mxu0 0.0
      %865 = vmatpush2.msra.mxu0 0.0
      %866 = vmatprep.subr.mxu0 0.0
      %867 = vmatpush2.msra.mxu0 0.0
      %868 = vmatprep.mubr.f32.mxu0 0.0
      %869 = vmatmul.mubr.f32.gmra.mxu0 %v802
      %v870 = vpop.f32.mrf.mxu0
      %v871 = vadd.f32 0.0, %v870
      %v872 = vpop.f32.mrf.mxu0
      %873 = vdwg.mxu0
      %v874 = vld [vmem:[#allocation4] sm:$0xff]
      %876 = vset.pattern.permute.xlu0 0
      %877 = vperm.xlu0 %876, %v780
      %v878 = vpop.permute.xlu0 %877
      %v880 = vmul.f32 %v878, %v874
      %882 = vrot.lane.b32.xlu0 %v871, 64
      %v883 = vpop.permute.xlu0 %882
      %v885 = vadd.f32 %v880, %v883
      %vm886 = vcmask 785920
      %887 = vst.msk [vmem:[#allocation4] sm:$0xff] %vm886, %v885
      %888 = vst.msk [vmem:[%s772] sm:$0xff] %vm402, %v777
      %v889 = vld [vmem:[%s256] sm:$0xff]
      %v890 = vmul.f32 %v889, 0.17677669
      %v891 = vld [vmem:[%s266] sm:$0xff]
      %v892 = vld [vmem:[%s276] sm:$0xff]
      %894 = vrot.lane.b32.xlu0 %v890, 32
      %v895 = vpop.permute.xlu0 %894
      %897 = vrot.lane.b32.xlu0 %v891, 32
      %v898 = vpop.permute.xlu0 %897
      %v899 = vsel %vm302, %v895, 0
      %v901 = vsel %vm302, %v898, 0
      %903 = vmatprep.subr.mxu0 0.0
      %904 = vmatpush1.xpose.msra.mxu0 0.0
      %905 = vmatprep.subr.mxu0 0.0
      %906 = vmatpush1.xpose.msra.mxu0 0.0
      %907 = vmatprep.subr.mxu0 0.0
      %908 = vmatpush1.xpose.msra.mxu0 0.0
      %909 = vmatprep.subr.mxu0 0.0
      %910 = vmatpush1.xpose.msra.mxu0 0.0
      %911 = vmatprep.subr.mxu0 0.0
      %912 = vmatpush1.xpose.msra.mxu0 0.0
      %913 = vmatprep.subr.mxu0 0.0
      %914 = vmatpush1.xpose.msra.mxu0 0.0
      %915 = vmatprep.subr.mxu0 0.0
      %916 = vmatpush1.xpose.msra.mxu0 0.0
      %917 = vmatprep.subr.mxu0 0.0
      %918 = vmatpush1.xpose.msra.mxu0 0.0
      %919 = vmatprep.subr.mxu0 0.0
      %920 = vmatpush1.xpose.msra.mxu0 0.0
      %921 = vmatprep.subr.mxu0 0.0
      %922 = vmatpush1.xpose.msra.mxu0 0.0
      %923 = vmatprep.subr.mxu0 0.0
      %924 = vmatpush1.xpose.msra.mxu0 0.0
      %925 = vmatprep.subr.mxu0 0.0
      %926 = vmatpush1.xpose.msra.mxu0 0.0
      %927 = vmatprep.subr.mxu0 0.0
      %928 = vmatpush1.xpose.msra.mxu0 0.0
      %929 = vmatprep.subr.mxu0 0.0
      %930 = vmatpush1.xpose.msra.mxu0 0.0
      %931 = vmatprep.subr.mxu0 0.0
      %932 = vmatpush1.xpose.msra.mxu0 0.0
      %933 = vmatprep.subr.mxu0 0.0
      %934 = vmatpush1.xpose.msra.mxu0 %v901
      %935 = vmatprep.subr.mxu0 0.0
      %936 = vmatpush2.xpose.msra.mxu0 0.0
      %937 = vmatprep.subr.mxu0 0.0
      %938 = vmatpush2.xpose.msra.mxu0 0.0
      %939 = vmatprep.subr.mxu0 0.0
      %940 = vmatpush2.xpose.msra.mxu0 0.0
      %941 = vmatprep.subr.mxu0 0.0
      %942 = vmatpush2.xpose.msra.mxu0 0.0
      %943 = vmatprep.subr.mxu0 0.0
      %944 = vmatpush2.xpose.msra.mxu0 0.0
      %945 = vmatprep.subr.mxu0 0.0
      %946 = vmatpush2.xpose.msra.mxu0 0.0
      %947 = vmatprep.subr.mxu0 0.0
      %948 = vmatpush2.xpose.msra.mxu0 0.0
      %949 = vmatprep.subr.mxu0 0.0
      %950 = vmatpush2.xpose.msra.mxu0 0.0
      %951 = vmatprep.subr.mxu0 0.0
      %952 = vmatpush2.xpose.msra.mxu0 0.0
      %953 = vmatprep.subr.mxu0 0.0
      %954 = vmatpush2.xpose.msra.mxu0 0.0
      %955 = vmatprep.subr.mxu0 0.0
      %956 = vmatpush2.xpose.msra.mxu0 0.0
      %957 = vmatprep.subr.mxu0 0.0
      %958 = vmatpush2.xpose.msra.mxu0 0.0
      %959 = vmatprep.subr.mxu0 0.0
      %960 = vmatpush2.xpose.msra.mxu0 0.0
      %961 = vmatprep.subr.mxu0 0.0
      %962 = vmatpush2.xpose.msra.mxu0 0.0
      %963 = vmatprep.subr.mxu0 0.0
      %964 = vmatpush2.xpose.msra.mxu0 0.0
      %965 = vmatprep.subr.mxu0 0.0
      %966 = vmatpush2.xpose.msra.mxu0 0.0
      %967 = vmatprep.mubr.f32.mxu0 0.0
      %968 = vmatmul.mubr.f32.gmra.mxu0 %v899
      %v969 = vpop.f32.mrf.mxu0
      %v970 = vadd.f32 0.0, %v969
      %v971 = vpop.f32.mrf.mxu0
      %972 = vdwg.mxu0
      %s973 = scalar_lea.vmem [#allocation2], 24
      %v974 = vld [vmem:[%s973] sm:$0xff]
      %v975 = vsel %vm380, %v970, -inf
      %976 = vmax.xlane.f32.xlu0 %v975
      %v977 = vpop.xlane.xlu0 %976
      %v978 = vmax.f32 %v974, %v977
      %v979 = vsub.f32 %v974, %v978
      %v980 = vmul.f32 %v979, 1.442695
      %v981 = vpow.pop %v980
      %983 = vset.pattern.permute.xlu0 0
      %984 = vperm.xlu0 %983, %v978
      %v985 = vpop.permute.xlu0 %984
      %v987 = vsub.f32 %v970, %v985
      %v988 = vmul.f32 %v987, 1.442695
      %v989 = vpow.pop %v988
      %s990 = scalar_lea.vmem [#allocation3], 24
      %v991 = vld [vmem:[%s990] sm:$0xff]
      %v992 = vmul.f32 %v981, %v991
      %v993 = vsel %vm380, %v989, 0.0
      %994 = vadd.xlane.f32.xlu0 %v993
      %v995 = vpop.xlane.xlu0 %994
      %v996 = vadd.f32 %v992, %v995
      %997 = vst.msk [vmem:[%s990] sm:$0xff] %vm402, %v996
      %999 = vrot.lane.b32.xlu0 %v892, 32
      %v1000 = vpop.permute.xlu0 %999
      %v1003 = vsel %vm380, %v989, 0
      %1005 = vmatprep.subr.mxu0 0.0
      %1006 = vmatpush1.msra.mxu0 0.0
      %1007 = vmatprep.subr.mxu0 0.0
      %1008 = vmatpush1.msra.mxu0 0.0
      %1009 = vmatprep.subr.mxu0 0.0
      %1010 = vmatpush1.msra.mxu0 0.0
      %1011 = vmatprep.subr.mxu0 0.0
      %1012 = vmatpush1.msra.mxu0 0.0
      %1013 = vmatprep.subr.mxu0 0.0
      %1014 = vmatpush1.msra.mxu0 0.0
      %1015 = vmatprep.subr.mxu0 0.0
      %1016 = vmatpush1.msra.mxu0 0.0
      %1017 = vmatprep.subr.mxu0 0.0
      %1018 = vmatpush1.msra.mxu0 0.0
      %1019 = vmatprep.subr.mxu0 0.0
      %1020 = vmatpush1.msra.mxu0 0.0
      %1021 = vmatprep.subr.mxu0 0.0
      %1022 = vmatpush1.msra.mxu0 0.0
      %1023 = vmatprep.subr.mxu0 0.0
      %1024 = vmatpush1.msra.mxu0 0.0
      %1025 = vmatprep.subr.mxu0 0.0
      %1026 = vmatpush1.msra.mxu0 0.0
      %1027 = vmatprep.subr.mxu0 0.0
      %1028 = vmatpush1.msra.mxu0 0.0
      %1029 = vmatprep.subr.mxu0 0.0
      %1030 = vmatpush1.msra.mxu0 0.0
      %1031 = vmatprep.subr.mxu0 0.0
      %1032 = vmatpush1.msra.mxu0 0.0
      %1033 = vmatprep.subr.mxu0 0.0
      %1034 = vmatpush1.msra.mxu0 0.0
      %1035 = vmatprep.subr.mxu0 0.0
      %1036 = vmatpush1.msra.mxu0 %v1000
      %1037 = vmatprep.subr.mxu0 0.0
      %1038 = vmatpush2.msra.mxu0 0.0
      %1039 = vmatprep.subr.mxu0 0.0
      %1040 = vmatpush2.msra.mxu0 0.0
      %1041 = vmatprep.subr.mxu0 0.0
      %1042 = vmatpush2.msra.mxu0 0.0
      %1043 = vmatprep.subr.mxu0 0.0
      %1044 = vmatpush2.msra.mxu0 0.0
      %1045 = vmatprep.subr.mxu0 0.0
      %1046 = vmatpush2.msra.mxu0 0.0
      %1047 = vmatprep.subr.mxu0 0.0
      %1048 = vmatpush2.msra.mxu0 0.0
      %1049 = vmatprep.subr.mxu0 0.0
      %1050 = vmatpush2.msra.mxu0 0.0
      %1051 = vmatprep.subr.mxu0 0.0
      %1052 = vmatpush2.msra.mxu0 0.0
      %1053 = vmatprep.subr.mxu0 0.0
      %1054 = vmatpush2.msra.mxu0 0.0
      %1055 = vmatprep.subr.mxu0 0.0
      %1056 = vmatpush2.msra.mxu0 0.0
      %1057 = vmatprep.subr.mxu0 0.0
      %1058 = vmatpush2.msra.mxu0 0.0
      %1059 = vmatprep.subr.mxu0 0.0
      %1060 = vmatpush2.msra.mxu0 0.0
      %1061 = vmatprep.subr.mxu0 0.0
      %1062 = vmatpush2.msra.mxu0 0.0
      %1063 = vmatprep.subr.mxu0 0.0
      %1064 = vmatpush2.msra.mxu0 0.0
      %1065 = vmatprep.subr.mxu0 0.0
      %1066 = vmatpush2.msra.mxu0 0.0
      %1067 = vmatprep.subr.mxu0 0.0
      %1068 = vmatpush2.msra.mxu0 0.0
      %1069 = vmatprep.mubr.f32.mxu0 0.0
      %1070 = vmatmul.mubr.f32.gmra.mxu0 %v1003
      %v1071 = vpop.f32.mrf.mxu0
      %v1072 = vadd.f32 0.0, %v1071
      %v1073 = vpop.f32.mrf.mxu0
      %1074 = vdwg.mxu0
      %v1075 = vld [vmem:[#allocation4] sm:$0xff]
      %1077 = vset.pattern.permute.xlu0 0
      %1078 = vperm.xlu0 %1077, %v981
      %v1079 = vpop.permute.xlu0 %1078
      %v1081 = vmul.f32 %v1079, %v1075
      %1083 = vrot.lane.b32.xlu0 %v1072, 96
      %v1084 = vpop.permute.xlu0 %1083
      %v1086 = vadd.f32 %v1081, %v1084
      %vm1087 = vcmask 1048320
      %1088 = vst.msk [vmem:[#allocation4] sm:$0xff] %vm1087, %v1086
      %1089 = vst.msk [vmem:[%s973] sm:$0xff] %vm402, %v978
      // Predicated region
      $region37: #{multi_head_attention.4} parent=31 // pred_check
        %p1090 = pneg %p284
      $region38: #{multi_head_attention.4} parent=31 // pred_check_branch
        %1092 = sbr.rel (%p1090) target = $region40
      $region39: #{multi_head_attention.4} parent=31 // pred_region
        %v1093 = vld [vmem:[#allocation3] sm:$0xff]
        %v1094 = vrcp.pop %v1093
        %v1095 = vld [vmem:[#allocation4] sm:$0xff]
        %1097 = vset.pattern.permute.xlu0 0
        %1098 = vperm.xlu0 %1097, %v1094
        %v1099 = vpop.permute.xlu0 %1098
        %v1101 = vmul.f32 %v1095, %v1099
        %1102 = vst.msk [vmem:[#allocation4] sm:$0xff] %vm302, %v1101
        %v1103 = vld [vmem:[%s588] sm:$0xff]
        %v1104 = vrcp.pop %v1103
        %v1105 = vld [vmem:[#allocation4] sm:$0xff]
        %1107 = vset.pattern.permute.xlu0 0
        %1108 = vperm.xlu0 %1107, %v1104
        %v1109 = vpop.permute.xlu0 %1108
        %v1111 = vmul.f32 %v1105, %v1109
        %1112 = vst.msk [vmem:[#allocation4] sm:$0xff] %vm685, %v1111
        %v1113 = vld [vmem:[%s789] sm:$0xff]
        %v1114 = vrcp.pop %v1113
        %v1115 = vld [vmem:[#allocation4] sm:$0xff]
        %1117 = vset.pattern.permute.xlu0 0
        %1118 = vperm.xlu0 %1117, %v1114
        %v1119 = vpop.permute.xlu0 %1118
        %v1121 = vmul.f32 %v1115, %v1119
        %1122 = vst.msk [vmem:[#allocation4] sm:$0xff] %vm886, %v1121
        %v1123 = vld [vmem:[%s990] sm:$0xff]
        %v1124 = vrcp.pop %v1123
        %v1125 = vld [vmem:[#allocation4] sm:$0xff]
        %1127 = vset.pattern.permute.xlu0 0
        %1128 = vperm.xlu0 %1127, %v1124
        %v1129 = vpop.permute.xlu0 %1128
        %v1131 = vmul.f32 %v1125, %v1129
        %1132 = vst.msk [vmem:[#allocation4] sm:$0xff] %vm1087, %v1131
        %v1133 = vld [vmem:[#allocation4] sm:$0xff]
        %1134 = vst [vmem:[%s283] sm:$0xff] %v1133
      $region40: #{multi_head_attention.4} parent=31 // pred_fallthru
        _
      %p1135 = scmp.lt.s32.totalorder %s19, 1
      %s1136 = scalar_select %p1135, %s19, 1
      %p1137 = scmp.lt.s32.totalorder %s20, 0
      %s1138 = scalar_select %p1137, %s20, 0
      %s1139 = sadd.s32 %s1138, %s1136
      %s1140 = smul.addr %s1139, 8
      %s1141 = scalar_lea.vmem %s3, %s1140
      // Predicated region
      $region41: #{multi_head_attention.4} parent=31 // pred_check
        %p1142 = pneg %p137
      $region42: #{multi_head_attention.4} parent=31 // pred_check_branch
        %1144 = sbr.rel (%p1142) target = $region44
      $region43: #{multi_head_attention.4} parent=31 // pred_region
        _
      $region44: #{multi_head_attention.4} parent=31 // pred_fallthru
        _
    $region32: #{multi_head_attention.4} parent=5 // pred_fallthru
      _
    %p1145 = scmp.le.s32.totalorder 2, %s9
    // Predicated region
    $region45: #{multi_head_attention.4} parent=5 // pred_check
      %p1146 = pneg %p1145
    $region46: #{multi_head_attention.4} parent=5 // pred_check_branch
      %1148 = sbr.rel (%p1146) target = $region48
    $region47: #{multi_head_attention.4} parent=5 // pred_region
      %s1149 = ssub.s32 %s9, 2
      // Predicated region
      $region49: #{multi_head_attention.4} parent=47 // pred_check
        %p1150 = pneg %p143
      $region50: #{multi_head_attention.4} parent=47 // pred_check_branch
        %1152 = sbr.rel (%p1150) target = $region52
      $region51: #{multi_head_attention.4} parent=47 // pred_region
        %p1153 = scmp.lt.s32.totalorder %s22, 1
        %s1154 = scalar_select %p1153, %s22, 1
        %p1155 = scmp.lt.s32.totalorder %s23, 0
        %s1156 = scalar_select %p1155, %s23, 0
        %s1157 = sadd.s32 %s1156, %s1154
        %s1158 = smul.addr %s1157, 8
        %s1159 = scalar_lea.vmem %s3, %s1158
      $region52: #{multi_head_attention.4} parent=47 // pred_fallthru
        _
    $region48: #{multi_head_attention.4} parent=5 // pred_fallthru
      _
  $region6: #{multi_head_attention.4} parent=0 // loop_footer
    %s13 = sadd.s32 1, %s9
  $region7: #{multi_head_attention.4} parent=0 // loop_footer_branch
    %8 = sbr.rel target = $region3
  $region8: #{multi_head_attention.4} parent=0 // loop_exit
    _

</llo_original>
